<compile_context>
chip_gen: v7x
topology: tpu7x:2x2x1
jax: 0.10.0
libtpu: 0.0.40
codegen_flags: <defaults>
</compile_context>

<pallas_src>
import functools

import jax
import jax.numpy as jnp
from jax.experimental import pallas as pl
from jax.experimental.pallas import tpu as pltpu


_PAD = 128  # left/right zero pad of the flattened spatial axis (128-aligned stores)


# ----------------------------- Pallas kernel --------------------------------

def fused_conv_bn_relu_kernel(x_ref, w_ref, gb_ref, o_ref, xpad_ref, *, eps, width):
    """Fully fused 3x3 conv (9 shifted-slice taps) + training-mode BatchNorm + ReLU.

    x_ref   : (N, Cin, H*W)          input, lane axis = H*W (lane-dense)
    w_ref   : (9, Cout, Cin)         conv weights, tap-major (t = kh*3 + kw)
    gb_ref  : (Cout, 2)              [:, 0] = BN gamma, [:, 1] = BN beta
    o_ref   : (N, Cout, H*W)         output; reshapes for free to NCHW in the wrapper
    xpad_ref: (N, Cin, H*W + 2*_PAD) VMEM scratch (zero-padded flattened input)
    """
    n_batch, c_out, hw = o_ref.shape

    # ---- in-kernel zero padding of the flattened spatial axis (replaces HBM im2col).
    xpad_ref[...] = jnp.zeros_like(xpad_ref)
    xpad_ref[:, :, _PAD:_PAD + hw] = x_ref[...]

    # ---- column masks for the w-direction taps (flattened-axis row wrap-around).
    col = jax.lax.broadcasted_iota(jnp.int32, (1, hw), 1) % width
    mask_l = (col != 0).astype(x_ref.dtype)           # dw = -1: zero output column w == 0
    mask_r = (col != width - 1).astype(x_ref.dtype)   # dw = +1: zero output column w == W-1

    # ---- 9 accumulating taps per batch element; each tap is a shifted lane-slice of the
    #      padded scratch (h-overrun falls into the zero pad) and one small MXU matmul.
    convs = []
    for n in range(n_batch):
        acc = jnp.zeros((c_out, hw), jnp.float32)
        for t in range(9):
            dh, dw = t // 3 - 1, t % 3 - 1
            start = _PAD + dh * width + dw
            xt = xpad_ref[n, :, start:start + hw]               # (Cin, HW)
            if dw == -1:
                xt = xt * mask_l
            elif dw == 1:
                xt = xt * mask_r
            acc = acc + jnp.dot(w_ref[t], xt, preferred_element_type=jnp.float32)
        convs.append(acc)

    # ---- single-pass BatchNorm statistics: sum and sum-of-squares in one sweep.
    #      var = E[x^2] - mean^2 (f32 is fine at this scale; use Welford if reused where
    #      channel means are large relative to spread).
    s_sum = jnp.zeros((c_out, 1), jnp.float32)
    s_sq = jnp.zeros((c_out, 1), jnp.float32)
    for acc in convs:
        s_sum = s_sum + jnp.sum(acc, axis=1, keepdims=True)
        s_sq = s_sq + jnp.sum(acc * acc, axis=1, keepdims=True)

    inv_cnt = jnp.float32(1.0 / (n_batch * hw))
    mean = s_sum * inv_cnt
    var = s_sq * inv_cnt - mean * mean
    gamma = gb_ref[:, 0:1].astype(jnp.float32)
    beta = gb_ref[:, 1:2].astype(jnp.float32)
    scale = gamma * jax.lax.rsqrt(var + eps)                    # (Cout, 1)
    shift = beta - mean * scale

    # ---- scale/shift + ReLU, lane-dense stores (each batch = one (Cout, HW) block).
    for n in range(n_batch):
        o_ref[n] = jnp.maximum(convs[n] * scale + shift, 0.0).astype(o_ref.dtype)


# ------------------------------ Python wrapper -------------------------------

def conv_block_forward(x_nchw, w_oihw, bias, gamma, beta, eps=1e-5,
                       compute_dtype=jnp.float32):
    """Conv2d(3x3, stride 1, pad 1) -> BatchNorm2d (training-mode batch stats) -> ReLU.

    NCHW in / NCHW out (PyTorch convention).  The conv bias cancels exactly under
    training-mode BN (mean shifts by b, y - mean unchanged), so it is not used.
    compute_dtype=jnp.bfloat16 halves the input DMA on v6e/v7x; keep f32 on v5e.
    """
    del bias  # exact no-op before training-mode BatchNorm (cancels in y - mean)

    N, Cin, H, W = x_nchw.shape
    Cout = w_oihw.shape[0]
    HW = H * W
    assert W + 1 <= _PAD, "spatial width too large for the fixed flattened-axis pad"

    # Layout plumbing only (no 9x im2col amplification, no HBM round trip):
    x_flat = x_nchw.reshape(N, Cin, HW).astype(compute_dtype)          # free reshape
    # OIHW -> (kh, kw, Cout, Cin) -> (9, Cout, Cin); tap order matches the kernel.
    w9 = jnp.transpose(w_oihw, (2, 3, 0, 1)).reshape(9, Cout, Cin).astype(compute_dtype)
    gb = jnp.stack([gamma, beta], axis=1).astype(jnp.float32)          # (Cout, 2)

    out = pl.pallas_call(
        functools.partial(fused_conv_bn_relu_kernel, eps=float(eps), width=W),
        out_shape=jax.ShapeDtypeStruct((N, Cout, HW), jnp.float32),
        in_specs=[
            pl.BlockSpec((N, Cin, HW), lambda: (0, 0, 0)),
            pl.BlockSpec((9, Cout, Cin), lambda: (0, 0, 0)),
            pl.BlockSpec((Cout, 2), lambda: (0, 0)),
        ],
        out_specs=pl.BlockSpec((N, Cout, HW), lambda: (0, 0, 0)),
        scratch_shapes=[pltpu.VMEM((N, Cin, HW + 2 * _PAD), compute_dtype)],
    )(x_flat, w9, gb)

    return out.reshape(N, Cout, H, W)                                  # free reshape


# ------------------------------ pure-JAX reference ---------------------------

def conv_block_ref(x_nchw, w_oihw, bias, gamma, beta, eps=1e-5):
    y = jax.lax.conv_general_dilated(
        x_nchw.astype(jnp.float32), w_oihw.astype(jnp.float32),
        window_strides=(1, 1), padding=((1, 1), (1, 1)),
        dimension_numbers=("NCHW", "OIHW", "NCHW"))
    y = y + bias.reshape(1, -1, 1, 1)
    mean = jnp.mean(y, axis=(0, 2, 3), keepdims=True)
    var = jnp.mean(jnp.square(y - mean), axis=(0, 2, 3), keepdims=True)
    yn = (y - mean) / jnp.sqrt(var + eps)
    yn = gamma.reshape(1, -1, 1, 1) * yn + beta.reshape(1, -1, 1, 1)
    return jnp.maximum(yn, 0.0)


# ----------------------------------- main ------------------------------------

if __name__ == "__main__":
    N, Cin, Cout, H, W = 2, 4, 8, 16, 16

    key = jax.random.PRNGKey(0)
    kx, kwt, kb = jax.random.split(key, 3)
    x = jax.random.normal(kx, (N, Cin, H, W), dtype=jnp.float32)
    # Conv2d parameters (synthetic init; shapes match nn.Conv2d(inc, outc, 3))
    w = jax.random.normal(kwt, (Cout, Cin, 3, 3), dtype=jnp.float32) * 0.1
    b = jax.random.normal(kb, (Cout,), dtype=jnp.float32) * 0.1
    # BatchNorm2d default init: weight=1, bias=0
    gamma = jnp.ones((Cout,), dtype=jnp.float32)
    beta = jnp.zeros((Cout,), dtype=jnp.float32)

    fwd = jax.jit(conv_block_forward)
    out = jax.block_until_ready(fwd(x, w, b, gamma, beta))

    ref = conv_block_ref(x, w, b, gamma, beta)
    assert out.shape == (N, Cout, H, W)
    assert jnp.allclose(out, ref, rtol=1e-4, atol=1e-4), "mismatch vs reference"

    print("KERNEL_OK")
</pallas_src>

<mosaic_0001>
module attributes {stable_mosaic.version = 11 : i64} {
  func.func @fused_conv_bn_relu_kernel(%arg0: memref<2x4x256xf32, #tpu.memory_space<vmem>>, %arg1: memref<9x8x4xf32, #tpu.memory_space<vmem>>, %arg2: memref<8x2xf32, #tpu.memory_space<vmem>>, %arg3: memref<2x8x256xf32, #tpu.memory_space<vmem>>, %arg4: memref<2x4x512xf32, #tpu.memory_space<vmem>>) attributes {dimension_semantics = [], scalar_prefetch = 0 : i64, scratch_operands = 1 : i64, tpu.core_type = #tpu.core_type<tc>} {
    %cst = arith.constant 0.000000e+00 : f32
    %0 = vector.broadcast %cst : f32 to vector<2x4x512xf32>
    %c0 = arith.constant 0 : index
    %c0_0 = arith.constant 0 : index
    %c0_1 = arith.constant 0 : index
    %1 = vector.load %arg4[%c0, %c0_0, %c0_1] : memref<2x4x512xf32, #tpu.memory_space<vmem>>, vector<2x4x512xf32>
    tpu.vector_store %arg4[%c0, %c0_0, %c0_1], %0 {strides = array<i32>} : memref<2x4x512xf32, #tpu.memory_space<vmem>>, vector<2x4x512xf32>,
    %c0_2 = arith.constant 0 : index
    %c0_3 = arith.constant 0 : index
    %c0_4 = arith.constant 0 : index
    %2 = vector.load %arg0[%c0_2, %c0_3, %c0_4] : memref<2x4x256xf32, #tpu.memory_space<vmem>>, vector<2x4x256xf32>
    %c0_5 = arith.constant 0 : index
    %c0_6 = arith.constant 0 : index
    %c128 = arith.constant 128 : index
    %3 = vector.load %arg4[%c0_5, %c0_6, %c128] : memref<2x4x512xf32, #tpu.memory_space<vmem>>, vector<2x4x256xf32>
    tpu.vector_store %arg4[%c0_5, %c0_6, %c128], %2 {strides = array<i32>} : memref<2x4x512xf32, #tpu.memory_space<vmem>>, vector<2x4x256xf32>,
    %4 = tpu.iota {dimensions = array<i32: 1>} : vector<1x256xi32>
    %c16_i32 = arith.constant 16 : i32
    %c0_i32 = arith.constant 0 : i32
    %5 = arith.cmpi eq, %c16_i32, %c0_i32 : i32
    %c1_i32 = arith.constant 1 : i32
    %6 = arith.select %5, %c1_i32, %c16_i32 : i32
    %7 = vector.broadcast %6 : i32 to vector<1x256xi32>
    %8 = arith.remsi %4, %7 : vector<1x256xi32>
    %c0_i32_7 = arith.constant 0 : i32
    %9 = vector.broadcast %c0_i32_7 : i32 to vector<1x256xi32>
    %10 = arith.cmpi ne, %8, %9 : vector<1x256xi32>
    %c0_i32_8 = arith.constant 0 : i32
    %11 = vector.broadcast %c0_i32_8 : i32 to vector<1x256xi32>
    %12 = arith.cmpi slt, %8, %11 : vector<1x256xi32>
    %c0_i32_9 = arith.constant 0 : i32
    %13 = arith.cmpi slt, %6, %c0_i32_9 : i32
    %14 = vector.broadcast %13 : i1 to vector<1x256xi1>
    %15 = vector.broadcast %14 : vector<1x256xi1> to vector<1x256xi1>
    %16 = arith.xori %12, %15 : vector<1x256xi1>
    %17 = arith.andi %16, %10 : vector<1x256xi1>
    %18 = vector.broadcast %6 : i32 to vector<1x256xi32>
    %19 = arith.addi %8, %18 : vector<1x256xi32>
    %20 = arith.select %17, %19, %8 : vector<1x256xi1>, vector<1x256xi32>
    %c0_i32_10 = arith.constant 0 : i32
    %21 = vector.broadcast %c0_i32_10 : i32 to vector<1x256xi32>
    %22 = arith.cmpi ne, %20, %21 : vector<1x256xi32>
    %23 = arith.extui %22 : vector<1x256xi1> to vector<1x256xi32>
    %24 = arith.sitofp %23 : vector<1x256xi32> to vector<1x256xf32>
    %c15_i32 = arith.constant 15 : i32
    %25 = vector.broadcast %c15_i32 : i32 to vector<1x256xi32>
    %26 = arith.cmpi ne, %20, %25 : vector<1x256xi32>
    %27 = arith.extui %26 : vector<1x256xi1> to vector<1x256xi32>
    %28 = arith.sitofp %27 : vector<1x256xi32> to vector<1x256xf32>
    %cst_11 = arith.constant 0.000000e+00 : f32
    %29 = vector.broadcast %cst_11 : f32 to vector<8x256xf32>
    %c0_12 = arith.constant 0 : index
    %c0_13 = arith.constant 0 : index
    %c111 = arith.constant 111 : index
    %30 = vector.load %arg4[%c0_12, %c0_13, %c111] : memref<2x4x512xf32, #tpu.memory_space<vmem>>, vector<1x4x256xf32>
    %31 = vector.shape_cast %30 : vector<1x4x256xf32> to vector<4x256xf32>
    %32 = vector.broadcast %24 : vector<1x256xf32> to vector<4x256xf32>
    %33 = arith.mulf %31, %32 : vector<4x256xf32>
    %c0_14 = arith.constant 0 : index
    %c0_15 = arith.constant 0 : index
    %c0_16 = arith.constant 0 : index
    %34 = vector.load %arg1[%c0_14, %c0_15, %c0_16] : memref<9x8x4xf32, #tpu.memory_space<vmem>>, vector<1x8x4xf32>
    %35 = vector.shape_cast %34 : vector<1x8x4xf32> to vector<8x4xf32>
    %cst_17 = arith.constant dense<0.000000e+00> : vector<8x256xf32>
    %36 = tpu.matmul %35, %33, %cst_17 {dimension_numbers = #tpu.dot_dimension_numbers<[1], [0], [0], [1], [0, 0, 1, 1], [], []>} : vector<8x4xf32>, vector<4x256xf32>, vector<8x256xf32> -> vector<8x256xf32>
    %37 = arith.addf %29, %36 : vector<8x256xf32>
    %c0_18 = arith.constant 0 : index
    %c0_19 = arith.constant 0 : index
    %c112 = arith.constant 112 : index
    %38 = vector.load %arg4[%c0_18, %c0_19, %c112] : memref<2x4x512xf32, #tpu.memory_space<vmem>>, vector<1x4x256xf32>
    %39 = vector.shape_cast %38 : vector<1x4x256xf32> to vector<4x256xf32>
    %c1 = arith.constant 1 : index
    %c0_20 = arith.constant 0 : index
    %c0_21 = arith.constant 0 : index
    %40 = vector.load %arg1[%c1, %c0_20, %c0_21] : memref<9x8x4xf32, #tpu.memory_space<vmem>>, vector<1x8x4xf32>
    %41 = vector.shape_cast %40 : vector<1x8x4xf32> to vector<8x4xf32>
    %cst_22 = arith.constant dense<0.000000e+00> : vector<8x256xf32>
    %42 = tpu.matmul %41, %39, %cst_22 {dimension_numbers = #tpu.dot_dimension_numbers<[1], [0], [0], [1], [0, 0, 1, 1], [], []>} : vector<8x4xf32>, vector<4x256xf32>, vector<8x256xf32> -> vector<8x256xf32>
    %43 = arith.addf %37, %42 : vector<8x256xf32>
    %c0_23 = arith.constant 0 : index
    %c0_24 = arith.constant 0 : index
    %c113 = arith.constant 113 : index
    %44 = vector.load %arg4[%c0_23, %c0_24, %c113] : memref<2x4x512xf32, #tpu.memory_space<vmem>>, vector<1x4x256xf32>
    %45 = vector.shape_cast %44 : vector<1x4x256xf32> to vector<4x256xf32>
    %46 = vector.broadcast %28 : vector<1x256xf32> to vector<4x256xf32>
    %47 = arith.mulf %45, %46 : vector<4x256xf32>
    %c2 = arith.constant 2 : index
    %c0_25 = arith.constant 0 : index
    %c0_26 = arith.constant 0 : index
    %48 = vector.load %arg1[%c2, %c0_25, %c0_26] : memref<9x8x4xf32, #tpu.memory_space<vmem>>, vector<1x8x4xf32>
    %49 = vector.shape_cast %48 : vector<1x8x4xf32> to vector<8x4xf32>
    %cst_27 = arith.constant dense<0.000000e+00> : vector<8x256xf32>
    %50 = tpu.matmul %49, %47, %cst_27 {dimension_numbers = #tpu.dot_dimension_numbers<[1], [0], [0], [1], [0, 0, 1, 1], [], []>} : vector<8x4xf32>, vector<4x256xf32>, vector<8x256xf32> -> vector<8x256xf32>
    %51 = arith.addf %43, %50 : vector<8x256xf32>
    %c0_28 = arith.constant 0 : index
    %c0_29 = arith.constant 0 : index
    %c127 = arith.constant 127 : index
    %52 = vector.load %arg4[%c0_28, %c0_29, %c127] : memref<2x4x512xf32, #tpu.memory_space<vmem>>, vector<1x4x256xf32>
    %53 = vector.shape_cast %52 : vector<1x4x256xf32> to vector<4x256xf32>
    %54 = vector.broadcast %24 : vector<1x256xf32> to vector<4x256xf32>
    %55 = arith.mulf %53, %54 : vector<4x256xf32>
    %c3 = arith.constant 3 : index
    %c0_30 = arith.constant 0 : index
    %c0_31 = arith.constant 0 : index
    %56 = vector.load %arg1[%c3, %c0_30, %c0_31] : memref<9x8x4xf32, #tpu.memory_space<vmem>>, vector<1x8x4xf32>
    %57 = vector.shape_cast %56 : vector<1x8x4xf32> to vector<8x4xf32>
    %cst_32 = arith.constant dense<0.000000e+00> : vector<8x256xf32>
    %58 = tpu.matmul %57, %55, %cst_32 {dimension_numbers = #tpu.dot_dimension_numbers<[1], [0], [0], [1], [0, 0, 1, 1], [], []>} : vector<8x4xf32>, vector<4x256xf32>, vector<8x256xf32> -> vector<8x256xf32>
    %59 = arith.addf %51, %58 : vector<8x256xf32>
    %c0_33 = arith.constant 0 : index
    %c0_34 = arith.constant 0 : index
    %c128_35 = arith.constant 128 : index
    %60 = vector.load %arg4[%c0_33, %c0_34, %c128_35] : memref<2x4x512xf32, #tpu.memory_space<vmem>>, vector<1x4x256xf32>
    %61 = vector.shape_cast %60 : vector<1x4x256xf32> to vector<4x256xf32>
    %c4 = arith.constant 4 : index
    %c0_36 = arith.constant 0 : index
    %c0_37 = arith.constant 0 : index
    %62 = vector.load %arg1[%c4, %c0_36, %c0_37] : memref<9x8x4xf32, #tpu.memory_space<vmem>>, vector<1x8x4xf32>
    %63 = vector.shape_cast %62 : vector<1x8x4xf32> to vector<8x4xf32>
    %cst_38 = arith.constant dense<0.000000e+00> : vector<8x256xf32>
    %64 = tpu.matmul %63, %61, %cst_38 {dimension_numbers = #tpu.dot_dimension_numbers<[1], [0], [0], [1], [0, 0, 1, 1], [], []>} : vector<8x4xf32>, vector<4x256xf32>, vector<8x256xf32> -> vector<8x256xf32>
    %65 = arith.addf %59, %64 : vector<8x256xf32>
    %c0_39 = arith.constant 0 : index
    %c0_40 = arith.constant 0 : index
    %c129 = arith.constant 129 : index
    %66 = vector.load %arg4[%c0_39, %c0_40, %c129] : memref<2x4x512xf32, #tpu.memory_space<vmem>>, vector<1x4x256xf32>
    %67 = vector.shape_cast %66 : vector<1x4x256xf32> to vector<4x256xf32>
    %68 = vector.broadcast %28 : vector<1x256xf32> to vector<4x256xf32>
    %69 = arith.mulf %67, %68 : vector<4x256xf32>
    %c5 = arith.constant 5 : index
    %c0_41 = arith.constant 0 : index
    %c0_42 = arith.constant 0 : index
    %70 = vector.load %arg1[%c5, %c0_41, %c0_42] : memref<9x8x4xf32, #tpu.memory_space<vmem>>, vector<1x8x4xf32>
    %71 = vector.shape_cast %70 : vector<1x8x4xf32> to vector<8x4xf32>
    %cst_43 = arith.constant dense<0.000000e+00> : vector<8x256xf32>
    %72 = tpu.matmul %71, %69, %cst_43 {dimension_numbers = #tpu.dot_dimension_numbers<[1], [0], [0], [1], [0, 0, 1, 1], [], []>} : vector<8x4xf32>, vector<4x256xf32>, vector<8x256xf32> -> vector<8x256xf32>
    %73 = arith.addf %65, %72 : vector<8x256xf32>
    %c0_44 = arith.constant 0 : index
    %c0_45 = arith.constant 0 : index
    %c143 = arith.constant 143 : index
    %74 = vector.load %arg4[%c0_44, %c0_45, %c143] : memref<2x4x512xf32, #tpu.memory_space<vmem>>, vector<1x4x256xf32>
    %75 = vector.shape_cast %74 : vector<1x4x256xf32> to vector<4x256xf32>
    %76 = vector.broadcast %24 : vector<1x256xf32> to vector<4x256xf32>
    %77 = arith.mulf %75, %76 : vector<4x256xf32>
    %c6 = arith.constant 6 : index
    %c0_46 = arith.constant 0 : index
    %c0_47 = arith.constant 0 : index
    %78 = vector.load %arg1[%c6, %c0_46, %c0_47] : memref<9x8x4xf32, #tpu.memory_space<vmem>>, vector<1x8x4xf32>
    %79 = vector.shape_cast %78 : vector<1x8x4xf32> to vector<8x4xf32>
    %cst_48 = arith.constant dense<0.000000e+00> : vector<8x256xf32>
    %80 = tpu.matmul %79, %77, %cst_48 {dimension_numbers = #tpu.dot_dimension_numbers<[1], [0], [0], [1], [0, 0, 1, 1], [], []>} : vector<8x4xf32>, vector<4x256xf32>, vector<8x256xf32> -> vector<8x256xf32>
    %81 = arith.addf %73, %80 : vector<8x256xf32>
    %c0_49 = arith.constant 0 : index
    %c0_50 = arith.constant 0 : index
    %c144 = arith.constant 144 : index
    %82 = vector.load %arg4[%c0_49, %c0_50, %c144] : memref<2x4x512xf32, #tpu.memory_space<vmem>>, vector<1x4x256xf32>
    %83 = vector.shape_cast %82 : vector<1x4x256xf32> to vector<4x256xf32>
    %c7 = arith.constant 7 : index
    %c0_51 = arith.constant 0 : index
    %c0_52 = arith.constant 0 : index
    %84 = vector.load %arg1[%c7, %c0_51, %c0_52] : memref<9x8x4xf32, #tpu.memory_space<vmem>>, vector<1x8x4xf32>
    %85 = vector.shape_cast %84 : vector<1x8x4xf32> to vector<8x4xf32>
    %cst_53 = arith.constant dense<0.000000e+00> : vector<8x256xf32>
    %86 = tpu.matmul %85, %83, %cst_53 {dimension_numbers = #tpu.dot_dimension_numbers<[1], [0], [0], [1], [0, 0, 1, 1], [], []>} : vector<8x4xf32>, vector<4x256xf32>, vector<8x256xf32> -> vector<8x256xf32>
    %87 = arith.addf %81, %86 : vector<8x256xf32>
    %c0_54 = arith.constant 0 : index
    %c0_55 = arith.constant 0 : index
    %c145 = arith.constant 145 : index
    %88 = vector.load %arg4[%c0_54, %c0_55, %c145] : memref<2x4x512xf32, #tpu.memory_space<vmem>>, vector<1x4x256xf32>
    %89 = vector.shape_cast %88 : vector<1x4x256xf32> to vector<4x256xf32>
    %90 = vector.broadcast %28 : vector<1x256xf32> to vector<4x256xf32>
    %91 = arith.mulf %89, %90 : vector<4x256xf32>
    %c8 = arith.constant 8 : index
    %c0_56 = arith.constant 0 : index
    %c0_57 = arith.constant 0 : index
    %92 = vector.load %arg1[%c8, %c0_56, %c0_57] : memref<9x8x4xf32, #tpu.memory_space<vmem>>, vector<1x8x4xf32>
    %93 = vector.shape_cast %92 : vector<1x8x4xf32> to vector<8x4xf32>
    %cst_58 = arith.constant dense<0.000000e+00> : vector<8x256xf32>
    %94 = tpu.matmul %93, %91, %cst_58 {dimension_numbers = #tpu.dot_dimension_numbers<[1], [0], [0], [1], [0, 0, 1, 1], [], []>} : vector<8x4xf32>, vector<4x256xf32>, vector<8x256xf32> -> vector<8x256xf32>
    %95 = arith.addf %87, %94 : vector<8x256xf32>
    %cst_59 = arith.constant 0.000000e+00 : f32
    %96 = vector.broadcast %cst_59 : f32 to vector<8x256xf32>
    %c1_60 = arith.constant 1 : index
    %c0_61 = arith.constant 0 : index
    %c111_62 = arith.constant 111 : index
    %97 = vector.load %arg4[%c1_60, %c0_61, %c111_62] : memref<2x4x512xf32, #tpu.memory_space<vmem>>, vector<1x4x256xf32>
    %98 = vector.shape_cast %97 : vector<1x4x256xf32> to vector<4x256xf32>
    %99 = vector.broadcast %24 : vector<1x256xf32> to vector<4x256xf32>
    %100 = arith.mulf %98, %99 : vector<4x256xf32>
    %c0_63 = arith.constant 0 : index
    %c0_64 = arith.constant 0 : index
    %c0_65 = arith.constant 0 : index
    %101 = vector.load %arg1[%c0_63, %c0_64, %c0_65] : memref<9x8x4xf32, #tpu.memory_space<vmem>>, vector<1x8x4xf32>
    %102 = vector.shape_cast %101 : vector<1x8x4xf32> to vector<8x4xf32>
    %cst_66 = arith.constant dense<0.000000e+00> : vector<8x256xf32>
    %103 = tpu.matmul %102, %100, %cst_66 {dimension_numbers = #tpu.dot_dimension_numbers<[1], [0], [0], [1], [0, 0, 1, 1], [], []>} : vector<8x4xf32>, vector<4x256xf32>, vector<8x256xf32> -> vector<8x256xf32>
    %104 = arith.addf %96, %103 : vector<8x256xf32>
    %c1_67 = arith.constant 1 : index
    %c0_68 = arith.constant 0 : index
    %c112_69 = arith.constant 112 : index
    %105 = vector.load %arg4[%c1_67, %c0_68, %c112_69] : memref<2x4x512xf32, #tpu.memory_space<vmem>>, vector<1x4x256xf32>
    %106 = vector.shape_cast %105 : vector<1x4x256xf32> to vector<4x256xf32>
    %c1_70 = arith.constant 1 : index
    %c0_71 = arith.constant 0 : index
    %c0_72 = arith.constant 0 : index
    %107 = vector.load %arg1[%c1_70, %c0_71, %c0_72] : memref<9x8x4xf32, #tpu.memory_space<vmem>>, vector<1x8x4xf32>
    %108 = vector.shape_cast %107 : vector<1x8x4xf32> to vector<8x4xf32>
    %cst_73 = arith.constant dense<0.000000e+00> : vector<8x256xf32>
    %109 = tpu.matmul %108, %106, %cst_73 {dimension_numbers = #tpu.dot_dimension_numbers<[1], [0], [0], [1], [0, 0, 1, 1], [], []>} : vector<8x4xf32>, vector<4x256xf32>, vector<8x256xf32> -> vector<8x256xf32>
    %110 = arith.addf %104, %109 : vector<8x256xf32>
    %c1_74 = arith.constant 1 : index
    %c0_75 = arith.constant 0 : index
    %c113_76 = arith.constant 113 : index
    %111 = vector.load %arg4[%c1_74, %c0_75, %c113_76] : memref<2x4x512xf32, #tpu.memory_space<vmem>>, vector<1x4x256xf32>
    %112 = vector.shape_cast %111 : vector<1x4x256xf32> to vector<4x256xf32>
    %113 = vector.broadcast %28 : vector<1x256xf32> to vector<4x256xf32>
    %114 = arith.mulf %112, %113 : vector<4x256xf32>
    %c2_77 = arith.constant 2 : index
    %c0_78 = arith.constant 0 : index
    %c0_79 = arith.constant 0 : index
    %115 = vector.load %arg1[%c2_77, %c0_78, %c0_79] : memref<9x8x4xf32, #tpu.memory_space<vmem>>, vector<1x8x4xf32>
    %116 = vector.shape_cast %115 : vector<1x8x4xf32> to vector<8x4xf32>
    %cst_80 = arith.constant dense<0.000000e+00> : vector<8x256xf32>
    %117 = tpu.matmul %116, %114, %cst_80 {dimension_numbers = #tpu.dot_dimension_numbers<[1], [0], [0], [1], [0, 0, 1, 1], [], []>} : vector<8x4xf32>, vector<4x256xf32>, vector<8x256xf32> -> vector<8x256xf32>
    %118 = arith.addf %110, %117 : vector<8x256xf32>
    %c1_81 = arith.constant 1 : index
    %c0_82 = arith.constant 0 : index
    %c127_83 = arith.constant 127 : index
    %119 = vector.load %arg4[%c1_81, %c0_82, %c127_83] : memref<2x4x512xf32, #tpu.memory_space<vmem>>, vector<1x4x256xf32>
    %120 = vector.shape_cast %119 : vector<1x4x256xf32> to vector<4x256xf32>
    %121 = vector.broadcast %24 : vector<1x256xf32> to vector<4x256xf32>
    %122 = arith.mulf %120, %121 : vector<4x256xf32>
    %c3_84 = arith.constant 3 : index
    %c0_85 = arith.constant 0 : index
    %c0_86 = arith.constant 0 : index
    %123 = vector.load %arg1[%c3_84, %c0_85, %c0_86] : memref<9x8x4xf32, #tpu.memory_space<vmem>>, vector<1x8x4xf32>
    %124 = vector.shape_cast %123 : vector<1x8x4xf32> to vector<8x4xf32>
    %cst_87 = arith.constant dense<0.000000e+00> : vector<8x256xf32>
    %125 = tpu.matmul %124, %122, %cst_87 {dimension_numbers = #tpu.dot_dimension_numbers<[1], [0], [0], [1], [0, 0, 1, 1], [], []>} : vector<8x4xf32>, vector<4x256xf32>, vector<8x256xf32> -> vector<8x256xf32>
    %126 = arith.addf %118, %125 : vector<8x256xf32>
    %c1_88 = arith.constant 1 : index
    %c0_89 = arith.constant 0 : index
    %c128_90 = arith.constant 128 : index
    %127 = vector.load %arg4[%c1_88, %c0_89, %c128_90] : memref<2x4x512xf32, #tpu.memory_space<vmem>>, vector<1x4x256xf32>
    %128 = vector.shape_cast %127 : vector<1x4x256xf32> to vector<4x256xf32>
    %c4_91 = arith.constant 4 : index
    %c0_92 = arith.constant 0 : index
    %c0_93 = arith.constant 0 : index
    %129 = vector.load %arg1[%c4_91, %c0_92, %c0_93] : memref<9x8x4xf32, #tpu.memory_space<vmem>>, vector<1x8x4xf32>
    %130 = vector.shape_cast %129 : vector<1x8x4xf32> to vector<8x4xf32>
    %cst_94 = arith.constant dense<0.000000e+00> : vector<8x256xf32>
    %131 = tpu.matmul %130, %128, %cst_94 {dimension_numbers = #tpu.dot_dimension_numbers<[1], [0], [0], [1], [0, 0, 1, 1], [], []>} : vector<8x4xf32>, vector<4x256xf32>, vector<8x256xf32> -> vector<8x256xf32>
    %132 = arith.addf %126, %131 : vector<8x256xf32>
    %c1_95 = arith.constant 1 : index
    %c0_96 = arith.constant 0 : index
    %c129_97 = arith.constant 129 : index
    %133 = vector.load %arg4[%c1_95, %c0_96, %c129_97] : memref<2x4x512xf32, #tpu.memory_space<vmem>>, vector<1x4x256xf32>
    %134 = vector.shape_cast %133 : vector<1x4x256xf32> to vector<4x256xf32>
    %135 = vector.broadcast %28 : vector<1x256xf32> to vector<4x256xf32>
    %136 = arith.mulf %134, %135 : vector<4x256xf32>
    %c5_98 = arith.constant 5 : index
    %c0_99 = arith.constant 0 : index
    %c0_100 = arith.constant 0 : index
    %137 = vector.load %arg1[%c5_98, %c0_99, %c0_100] : memref<9x8x4xf32, #tpu.memory_space<vmem>>, vector<1x8x4xf32>
    %138 = vector.shape_cast %137 : vector<1x8x4xf32> to vector<8x4xf32>
    %cst_101 = arith.constant dense<0.000000e+00> : vector<8x256xf32>
    %139 = tpu.matmul %138, %136, %cst_101 {dimension_numbers = #tpu.dot_dimension_numbers<[1], [0], [0], [1], [0, 0, 1, 1], [], []>} : vector<8x4xf32>, vector<4x256xf32>, vector<8x256xf32> -> vector<8x256xf32>
    %140 = arith.addf %132, %139 : vector<8x256xf32>
    %c1_102 = arith.constant 1 : index
    %c0_103 = arith.constant 0 : index
    %c143_104 = arith.constant 143 : index
    %141 = vector.load %arg4[%c1_102, %c0_103, %c143_104] : memref<2x4x512xf32, #tpu.memory_space<vmem>>, vector<1x4x256xf32>
    %142 = vector.shape_cast %141 : vector<1x4x256xf32> to vector<4x256xf32>
    %143 = vector.broadcast %24 : vector<1x256xf32> to vector<4x256xf32>
    %144 = arith.mulf %142, %143 : vector<4x256xf32>
    %c6_105 = arith.constant 6 : index
    %c0_106 = arith.constant 0 : index
    %c0_107 = arith.constant 0 : index
    %145 = vector.load %arg1[%c6_105, %c0_106, %c0_107] : memref<9x8x4xf32, #tpu.memory_space<vmem>>, vector<1x8x4xf32>
    %146 = vector.shape_cast %145 : vector<1x8x4xf32> to vector<8x4xf32>
    %cst_108 = arith.constant dense<0.000000e+00> : vector<8x256xf32>
    %147 = tpu.matmul %146, %144, %cst_108 {dimension_numbers = #tpu.dot_dimension_numbers<[1], [0], [0], [1], [0, 0, 1, 1], [], []>} : vector<8x4xf32>, vector<4x256xf32>, vector<8x256xf32> -> vector<8x256xf32>
    %148 = arith.addf %140, %147 : vector<8x256xf32>
    %c1_109 = arith.constant 1 : index
    %c0_110 = arith.constant 0 : index
    %c144_111 = arith.constant 144 : index
    %149 = vector.load %arg4[%c1_109, %c0_110, %c144_111] : memref<2x4x512xf32, #tpu.memory_space<vmem>>, vector<1x4x256xf32>
    %150 = vector.shape_cast %149 : vector<1x4x256xf32> to vector<4x256xf32>
    %c7_112 = arith.constant 7 : index
    %c0_113 = arith.constant 0 : index
    %c0_114 = arith.constant 0 : index
    %151 = vector.load %arg1[%c7_112, %c0_113, %c0_114] : memref<9x8x4xf32, #tpu.memory_space<vmem>>, vector<1x8x4xf32>
    %152 = vector.shape_cast %151 : vector<1x8x4xf32> to vector<8x4xf32>
    %cst_115 = arith.constant dense<0.000000e+00> : vector<8x256xf32>
    %153 = tpu.matmul %152, %150, %cst_115 {dimension_numbers = #tpu.dot_dimension_numbers<[1], [0], [0], [1], [0, 0, 1, 1], [], []>} : vector<8x4xf32>, vector<4x256xf32>, vector<8x256xf32> -> vector<8x256xf32>
    %154 = arith.addf %148, %153 : vector<8x256xf32>
    %c1_116 = arith.constant 1 : index
    %c0_117 = arith.constant 0 : index
    %c145_118 = arith.constant 145 : index
    %155 = vector.load %arg4[%c1_116, %c0_117, %c145_118] : memref<2x4x512xf32, #tpu.memory_space<vmem>>, vector<1x4x256xf32>
    %156 = vector.shape_cast %155 : vector<1x4x256xf32> to vector<4x256xf32>
    %157 = vector.broadcast %28 : vector<1x256xf32> to vector<4x256xf32>
    %158 = arith.mulf %156, %157 : vector<4x256xf32>
    %c8_119 = arith.constant 8 : index
    %c0_120 = arith.constant 0 : index
    %c0_121 = arith.constant 0 : index
    %159 = vector.load %arg1[%c8_119, %c0_120, %c0_121] : memref<9x8x4xf32, #tpu.memory_space<vmem>>, vector<1x8x4xf32>
    %160 = vector.shape_cast %159 : vector<1x8x4xf32> to vector<8x4xf32>
    %cst_122 = arith.constant dense<0.000000e+00> : vector<8x256xf32>
    %161 = tpu.matmul %160, %158, %cst_122 {dimension_numbers = #tpu.dot_dimension_numbers<[1], [0], [0], [1], [0, 0, 1, 1], [], []>} : vector<8x4xf32>, vector<4x256xf32>, vector<8x256xf32> -> vector<8x256xf32>
    %162 = arith.addf %154, %161 : vector<8x256xf32>
    %cst_123 = arith.constant 0.000000e+00 : f32
    %163 = vector.broadcast %cst_123 : f32 to vector<8x1xf32>
    %cst_124 = arith.constant 0.000000e+00 : f32
    %164 = vector.broadcast %cst_124 : f32 to vector<8x1xf32>
    %cst_125 = arith.constant dense<0.000000e+00> : vector<8xf32>
    %165 = vector.multi_reduction <add>, %95, %cst_125 [1] : vector<8x256xf32> to vector<8xf32>
    %166 = vector.shape_cast %165 : vector<8xf32> to vector<8x1xf32>
    %167 = arith.addf %163, %166 : vector<8x1xf32>
    %168 = arith.mulf %95, %95 : vector<8x256xf32>
    %cst_126 = arith.constant dense<0.000000e+00> : vector<8xf32>
    %169 = vector.multi_reduction <add>, %168, %cst_126 [1] : vector<8x256xf32> to vector<8xf32>
    %170 = vector.shape_cast %169 : vector<8xf32> to vector<8x1xf32>
    %171 = arith.addf %164, %170 : vector<8x1xf32>
    %cst_127 = arith.constant dense<0.000000e+00> : vector<8xf32>
    %172 = vector.multi_reduction <add>, %162, %cst_127 [1] : vector<8x256xf32> to vector<8xf32>
    %173 = vector.shape_cast %172 : vector<8xf32> to vector<8x1xf32>
    %174 = arith.addf %167, %173 : vector<8x1xf32>
    %175 = arith.mulf %162, %162 : vector<8x256xf32>
    %cst_128 = arith.constant dense<0.000000e+00> : vector<8xf32>
    %176 = vector.multi_reduction <add>, %175, %cst_128 [1] : vector<8x256xf32> to vector<8xf32>
    %177 = vector.shape_cast %176 : vector<8xf32> to vector<8x1xf32>
    %178 = arith.addf %171, %177 : vector<8x1xf32>
    %cst_129 = arith.constant 0.001953125 : f32
    %179 = vector.broadcast %cst_129 : f32 to vector<8x1xf32>
    %180 = arith.mulf %174, %179 : vector<8x1xf32>
    %cst_130 = arith.constant 0.001953125 : f32
    %181 = vector.broadcast %cst_130 : f32 to vector<8x1xf32>
    %182 = arith.mulf %178, %181 : vector<8x1xf32>
    %183 = arith.mulf %180, %180 : vector<8x1xf32>
    %184 = arith.subf %182, %183 : vector<8x1xf32>
    %c0_131 = arith.constant 0 : index
    %c0_132 = arith.constant 0 : index
    %185 = vector.load %arg2[%c0_131, %c0_132] : memref<8x2xf32, #tpu.memory_space<vmem>>, vector<8x1xf32>
    %c0_133 = arith.constant 0 : index
    %c1_134 = arith.constant 1 : index
    %186 = vector.load %arg2[%c0_133, %c1_134] : memref<8x2xf32, #tpu.memory_space<vmem>>, vector<8x1xf32>
    %cst_135 = arith.constant 9.99999974E-6 : f32
    %187 = vector.broadcast %cst_135 : f32 to vector<8x1xf32>
    %188 = arith.addf %184, %187 : vector<8x1xf32>
    %189 = math.rsqrt %188 : vector<8x1xf32>
    %190 = arith.mulf %185, %189 : vector<8x1xf32>
    %191 = arith.mulf %180, %190 : vector<8x1xf32>
    %192 = arith.subf %186, %191 : vector<8x1xf32>
    %193 = vector.broadcast %190 : vector<8x1xf32> to vector<8x256xf32>
    %194 = arith.mulf %95, %193 : vector<8x256xf32>
    %195 = vector.broadcast %192 : vector<8x1xf32> to vector<8x256xf32>
    %196 = arith.addf %194, %195 : vector<8x256xf32>
    %cst_136 = arith.constant 0.000000e+00 : f32
    %197 = vector.broadcast %cst_136 : f32 to vector<8x256xf32>
    %198 = arith.maximumf %196, %197 : vector<8x256xf32>
    %c0_137 = arith.constant 0 : index
    %c0_138 = arith.constant 0 : index
    %c0_139 = arith.constant 0 : index
    %199 = vector.load %arg3[%c0_137, %c0_138, %c0_139] : memref<2x8x256xf32, #tpu.memory_space<vmem>>, vector<1x8x256xf32>
    %200 = vector.shape_cast %199 : vector<1x8x256xf32> to vector<8x256xf32>
    %201 = vector.shape_cast %198 : vector<8x256xf32> to vector<1x8x256xf32>
    tpu.vector_store %arg3[%c0_137, %c0_138, %c0_139], %201 {strides = array<i32>} : memref<2x8x256xf32, #tpu.memory_space<vmem>>, vector<1x8x256xf32>,
    %202 = vector.broadcast %190 : vector<8x1xf32> to vector<8x256xf32>
    %203 = arith.mulf %162, %202 : vector<8x256xf32>
    %204 = vector.broadcast %192 : vector<8x1xf32> to vector<8x256xf32>
    %205 = arith.addf %203, %204 : vector<8x256xf32>
    %cst_140 = arith.constant 0.000000e+00 : f32
    %206 = vector.broadcast %cst_140 : f32 to vector<8x256xf32>
    %207 = arith.maximumf %205, %206 : vector<8x256xf32>
    %c1_141 = arith.constant 1 : index
    %c0_142 = arith.constant 0 : index
    %c0_143 = arith.constant 0 : index
    %208 = vector.load %arg3[%c1_141, %c0_142, %c0_143] : memref<2x8x256xf32, #tpu.memory_space<vmem>>, vector<1x8x256xf32>
    %209 = vector.shape_cast %208 : vector<1x8x256xf32> to vector<8x256xf32>
    %210 = vector.shape_cast %207 : vector<8x256xf32> to vector<1x8x256xf32>
    tpu.vector_store %arg3[%c1_141, %c0_142, %c0_143], %210 {strides = array<i32>} : memref<2x8x256xf32, #tpu.memory_space<vmem>>, vector<1x8x256xf32>,
    return
  }
}

</mosaic_0001>

<llo_original>
// kernel: conv_block_forward.1
$region0: #{conv_block_forward.1}
  #allocation0 [shape = 'u32[]', space=smem, size = 0x4, offset = 0x4, fixed_abs, tag = 'smem constant byte address 0x4 - core index']
  #allocation1 [shape = 'u32[144,128]{1,0:T(1,128)}', space=vmem, size = 0x12000, scoped, tag = 'internal scratch']
  #allocation2 [shape = 'f32[2,4,512]{2,1,0:T(4,128)}', space=vmem, size = 0x4000, scoped, tag = 'scratch operand']
  %s0 = inlined_call_operand.vmem [shape: f32[2,4,256], index: 0, kind: input, shape index: {}]
  %s1 = inlined_call_operand.vmem [shape: f32[9,8,4], index: 1, kind: input, shape index: {}]
  %s2 = inlined_call_operand.vmem [shape: f32[8,2], index: 2, kind: input, shape index: {}]
  %s3 = inlined_call_operand.vmem [shape: f32[2,8,256], index: 3, kind: output, shape index: {}]
  %s4 = sld [smem:[#allocation0]]
  $region22: #{conv_block_forward.1} parent=0
    _
  %s6 = ssub.s32 1, %s4
  %s7 = scalar_select 0, %s6, %s4
  // Predicated region
  $region2: #{conv_block_forward.1} parent=0 // pred_check
    _
  $region3: #{conv_block_forward.1} parent=0 // pred_check_branch
    %9 = sbr.rel (0) target = $region5
  $region4: #{conv_block_forward.1} parent=0 // pred_region
    _
  $region5: #{conv_block_forward.1} parent=0 // pred_fallthru
    _
  // Predicated region
  $region6: #{conv_block_forward.1} parent=0 // pred_check
    _
  $region7: #{conv_block_forward.1} parent=0 // pred_check_branch
    %11 = sbr.rel (0) target = $region9
  $region8: #{conv_block_forward.1} parent=0 // pred_region
    _
  $region9: #{conv_block_forward.1} parent=0 // pred_fallthru
    _
  // Predicated region
  $region10: #{conv_block_forward.1} parent=0 // pred_check
    _
  $region11: #{conv_block_forward.1} parent=0 // pred_check_branch
    %13 = sbr.rel (0) target = $region13
  $region12: #{conv_block_forward.1} parent=0 // pred_region
    _
  $region13: #{conv_block_forward.1} parent=0 // pred_fallthru
    _
  %14 = vst [vmem:[#allocation2] sm:$0xff] 0.0
  %15 = vst [vmem:[#allocation2 + $0x8] sm:$0xff] 0.0
  %16 = vst [vmem:[#allocation2 + $0x10] sm:$0xff] 0.0
  %17 = vst [vmem:[#allocation2 + $0x18] sm:$0xff] 0.0
  %v18 = vld [vmem:[%s0] sm:$0xff]
  %v19 = vld [vmem:[%s0 + $0x8] sm:$0xff]
  %20 = vst [vmem:[#allocation2 + $0x4] sm:$0xff] %v18
  %21 = vst [vmem:[#allocation2 + $0x14] sm:$0xff] %v19
  %v22 = vlaneseq
  %v23 = vand.u32 %v22, 127
  %v24 = vadd.s32 %v23, 128
  %vm25 = vcmp.lt.s32.totalorder %v23, 0
  %v26 = vsub.s32 0, %v23
  %v27 = vsel %vm25, %v26, %v23
  %v28 = vshrl.u32 %v27, 4
  %v29 = vand.u32 %v27, 15
  %v30 = vsub.s32 0, %v29
  %v31 = vsel %vm25, %v30, %v29
  %vm32 = vcmp.lt.s32.totalorder %v24, 0
  %v33 = vsub.s32 0, %v24
  %v34 = vsel %vm32, %v33, %v24
  %v35 = vshrl.u32 %v34, 4
  %v36 = vand.u32 %v34, 15
  %v37 = vsub.s32 0, %v36
  %v38 = vsel %vm32, %v37, %v36
  %vm39 = vcmp.ne.s32.totalorder %v31, 0
  %vm40 = vcmp.ne.s32.totalorder %v38, 0
  %vm41 = vcmp.lt.s32.totalorder %v31, 0
  %vm42 = vcmp.lt.s32.totalorder %v38, 0
  %vm43 = vmand %vm41, %vm39
  %vm44 = vmand %vm42, %vm40
  %v45 = vadd.s32 %v31, 16
  %v46 = vadd.s32 %v38, 16
  %v47 = vsel %vm43, %v45, %v31
  %v48 = vsel %vm44, %v46, %v38
  %vm49 = vcmp.ne.s32.totalorder %v47, 0
  %vm50 = vcmp.ne.s32.totalorder %v48, 0
  %v51 = vsel %vm49, 1, 0
  %v52 = vsel %vm50, 1, 0
  %v53 = vcvt.s32.f32 %v51
  %v54 = vcvt.s32.f32 %v52
  %vm55 = vcmp.ne.s32.totalorder %v47, 15
  %vm56 = vcmp.ne.s32.totalorder %v48, 15
  %v57 = vsel %vm55, 1, 0
  %v58 = vsel %vm56, 1, 0
  %v59 = vcvt.s32.f32 %v57
  %v60 = vcvt.s32.f32 %v58
  %v61 = vld [vmem:[#allocation2] sm:$0xff]
  %v62 = vld [vmem:[#allocation2 + $0x8] sm:$0xf]
  %v65 = vcombine.low %v53, %v54
  %66 = vrot.lane.b32.xlu0 %v65, 111
  %v67 = vpop.permute.xlu0 %66
  %v68 = vrot.slane %v67, 4
  %vm69 = vcmask 908288
  %v70 = vsel %vm69, %v68, %v67
  %v73 = vmul.f32 %v61, %v70
  %v74 = vmul.f32 %v62, %v68
  %v75 = vld [vmem:[%s1] sm:$0xff]
  %s76 = scalar_lea.vmem %s1, 8
  %v77 = vld [vmem:[%s76] sm:$0xff]
  %v80 = vcombine.high %v61, %v61
  %81 = vrot.lane.b32.xlu0 %v61, 16
  %v82 = vpop.permute.xlu0 %81
  %83 = vrot.lane.b32.xlu0 %v80, 16
  %v84 = vpop.permute.xlu0 %83
  %85 = vrot.lane.b32.xlu0 %v62, 16
  %v86 = vpop.permute.xlu0 %85
  %vm87 = vcmask 130048
  %v88 = vsel %vm87, %v82, %v84
  %v89 = vsel %vm87, %v84, %v86
  %vm90 = vcmask 31744
  %v92 = vsel %vm90, %v77, 0
  %vm94 = vcmask 1043456
  %v95 = vsel %vm94, %v88, 0
  %v97 = vsel %vm94, %v89, 0
  %99 = vmatprep.subr.mxu0 %v97
  %100 = vmatpush1.msra.mxu0 %v95
  %101 = vmatprep.subr.mxu0 0.0
  %102 = vmatpush1.msra.mxu0 0.0
  %103 = vmatprep.subr.mxu0 0.0
  %104 = vmatpush1.msra.mxu0 0.0
  %105 = vmatprep.subr.mxu0 0.0
  %106 = vmatpush1.msra.mxu0 0.0
  %107 = vmatprep.subr.mxu0 0.0
  %108 = vmatpush1.msra.mxu0 0.0
  %109 = vmatprep.subr.mxu0 0.0
  %110 = vmatpush1.msra.mxu0 0.0
  %111 = vmatprep.subr.mxu0 0.0
  %112 = vmatpush1.msra.mxu0 0.0
  %113 = vmatprep.subr.mxu0 0.0
  %114 = vmatpush1.msra.mxu0 0.0
  %115 = vmatprep.subr.mxu0 0.0
  %116 = vmatpush1.msra.mxu0 0.0
  %117 = vmatprep.subr.mxu0 0.0
  %118 = vmatpush1.msra.mxu0 0.0
  %119 = vmatprep.subr.mxu0 0.0
  %120 = vmatpush1.msra.mxu0 0.0
  %121 = vmatprep.subr.mxu0 0.0
  %122 = vmatpush1.msra.mxu0 0.0
  %123 = vmatprep.subr.mxu0 0.0
  %124 = vmatpush1.msra.mxu0 0.0
  %125 = vmatprep.subr.mxu0 0.0
  %126 = vmatpush1.msra.mxu0 0.0
  %127 = vmatprep.subr.mxu0 0.0
  %128 = vmatpush1.msra.mxu0 0.0
  %129 = vmatprep.subr.mxu0 0.0
  %130 = vmatpush1.msra.mxu0 0.0
  %131 = vmatprep.subr.mxu0 0.0
  %132 = vmatpush1.msra.mxu0 0.0
  %133 = vmatprep.subr.mxu0 0.0
  %134 = vmatpush1.msra.mxu0 0.0
  %135 = vmatprep.subr.mxu0 0.0
  %136 = vmatpush1.msra.mxu0 0.0
  %137 = vmatprep.subr.mxu0 0.0
  %138 = vmatpush1.msra.mxu0 0.0
  %139 = vmatprep.subr.mxu0 0.0
  %140 = vmatpush1.msra.mxu0 0.0
  %141 = vmatprep.subr.mxu0 0.0
  %142 = vmatpush1.msra.mxu0 0.0
  %143 = vmatprep.subr.mxu0 0.0
  %144 = vmatpush1.msra.mxu0 0.0
  %145 = vmatprep.subr.mxu0 0.0
  %146 = vmatpush1.msra.mxu0 0.0
  %147 = vmatprep.subr.mxu0 0.0
  %148 = vmatpush1.msra.mxu0 0.0
  %149 = vmatprep.subr.mxu0 0.0
  %150 = vmatpush1.msra.mxu0 0.0
  %151 = vmatprep.subr.mxu0 0.0
  %152 = vmatpush1.msra.mxu0 0.0
  %153 = vmatprep.subr.mxu0 0.0
  %154 = vmatpush1.msra.mxu0 0.0
  %155 = vmatprep.subr.mxu0 0.0
  %156 = vmatpush1.msra.mxu0 0.0
  %157 = vmatprep.subr.mxu0 0.0
  %158 = vmatpush1.msra.mxu0 0.0
  %159 = vmatprep.subr.mxu0 0.0
  %160 = vmatpush1.msra.mxu0 0.0
  %161 = vmatprep.subr.mxu0 0.0
  %162 = vmatpush1.msra.mxu0 0.0
  %163 = vmatprep.mubr.f32.mxu0 0.0
  %164 = vmatmul.mubr.f32.gmra.mrb[0].mxu0 %v92
  %v165 = vpop.f32.mrb[0].mxu0
  %v166 = vadd.f32 0.0, %v165
  %v167 = vpop.f32.mrb[0].mxu0
  %v168 = vadd.f32 0.0, %v167
  %169 = vdwg.mxu0
  %v172 = vcombine.high %v73, %v73
  %173 = vrot.lane.b32.xlu0 %v73, 17
  %v174 = vpop.permute.xlu0 %173
  %175 = vrot.lane.b32.xlu0 %v172, 17
  %v176 = vpop.permute.xlu0 %175
  %177 = vrot.lane.b32.xlu0 %v74, 17
  %v178 = vpop.permute.xlu0 %177
  %vm179 = vcmask 138240
  %v180 = vsel %vm179, %v174, %v176
  %v181 = vsel %vm179, %v176, %v178
  %v183 = vsel %vm90, %v75, 0
  %v185 = vsel %vm94, %v180, 0
  %v187 = vsel %vm94, %v181, 0
  %189 = vmatprep.subr.mxu0 %v187
  %190 = vmatpush1.msra.mxu0 %v185
  %191 = vmatprep.subr.mxu0 0.0
  %192 = vmatpush1.msra.mxu0 0.0
  %193 = vmatprep.subr.mxu0 0.0
  %194 = vmatpush1.msra.mxu0 0.0
  %195 = vmatprep.subr.mxu0 0.0
  %196 = vmatpush1.msra.mxu0 0.0
  %197 = vmatprep.subr.mxu0 0.0
  %198 = vmatpush1.msra.mxu0 0.0
  %199 = vmatprep.subr.mxu0 0.0
  %200 = vmatpush1.msra.mxu0 0.0
  %201 = vmatprep.subr.mxu0 0.0
  %202 = vmatpush1.msra.mxu0 0.0
  %203 = vmatprep.subr.mxu0 0.0
  %204 = vmatpush1.msra.mxu0 0.0
  %205 = vmatprep.subr.mxu0 0.0
  %206 = vmatpush1.msra.mxu0 0.0
  %207 = vmatprep.subr.mxu0 0.0
  %208 = vmatpush1.msra.mxu0 0.0
  %209 = vmatprep.subr.mxu0 0.0
  %210 = vmatpush1.msra.mxu0 0.0
  %211 = vmatprep.subr.mxu0 0.0
  %212 = vmatpush1.msra.mxu0 0.0
  %213 = vmatprep.subr.mxu0 0.0
  %214 = vmatpush1.msra.mxu0 0.0
  %215 = vmatprep.subr.mxu0 0.0
  %216 = vmatpush1.msra.mxu0 0.0
  %217 = vmatprep.subr.mxu0 0.0
  %218 = vmatpush1.msra.mxu0 0.0
  %219 = vmatprep.subr.mxu0 0.0
  %220 = vmatpush1.msra.mxu0 0.0
  %221 = vmatprep.subr.mxu0 0.0
  %222 = vmatpush1.msra.mxu0 0.0
  %223 = vmatprep.subr.mxu0 0.0
  %224 = vmatpush1.msra.mxu0 0.0
  %225 = vmatprep.subr.mxu0 0.0
  %226 = vmatpush1.msra.mxu0 0.0
  %227 = vmatprep.subr.mxu0 0.0
  %228 = vmatpush1.msra.mxu0 0.0
  %229 = vmatprep.subr.mxu0 0.0
  %230 = vmatpush1.msra.mxu0 0.0
  %231 = vmatprep.subr.mxu0 0.0
  %232 = vmatpush1.msra.mxu0 0.0
  %233 = vmatprep.subr.mxu0 0.0
  %234 = vmatpush1.msra.mxu0 0.0
  %235 = vmatprep.subr.mxu0 0.0
  %236 = vmatpush1.msra.mxu0 0.0
  %237 = vmatprep.subr.mxu0 0.0
  %238 = vmatpush1.msra.mxu0 0.0
  %239 = vmatprep.subr.mxu0 0.0
  %240 = vmatpush1.msra.mxu0 0.0
  %241 = vmatprep.subr.mxu0 0.0
  %242 = vmatpush1.msra.mxu0 0.0
  %243 = vmatprep.subr.mxu0 0.0
  %244 = vmatpush1.msra.mxu0 0.0
  %245 = vmatprep.subr.mxu0 0.0
  %246 = vmatpush1.msra.mxu0 0.0
  %247 = vmatprep.subr.mxu0 0.0
  %248 = vmatpush1.msra.mxu0 0.0
  %249 = vmatprep.subr.mxu0 0.0
  %250 = vmatpush1.msra.mxu0 0.0
  %251 = vmatprep.subr.mxu0 0.0
  %252 = vmatpush1.msra.mxu0 0.0
  %253 = vmatprep.mubr.f32.mxu0 0.0
  %254 = vmatmul.mubr.f32.gmra.mrb[0].mxu0 %v183
  %v255 = vpop.f32.mrb[0].mxu0
  %v256 = vadd.f32 %v166, %v255
  %v257 = vpop.f32.mrb[0].mxu0
  %v258 = vadd.f32 %v168, %v257
  %259 = vdwg.mxu0
  %v260 = vld [vmem:[#allocation2] sm:$0xff]
  %v261 = vld [vmem:[#allocation2 + $0x8] sm:$0xf]
  %v264 = vcombine.low %v59, %v60
  %265 = vrot.lane.b32.xlu0 %v264, 113
  %v266 = vpop.permute.xlu0 %265
  %v267 = vrot.slane %v266, 4
  %vm268 = vcmask 924672
  %v269 = vsel %vm268, %v267, %v266
  %v272 = vmul.f32 %v260, %v269
  %v273 = vmul.f32 %v261, %v267
  %s274 = scalar_lea.vmem %s1, 16
  %v275 = vld [vmem:[%s274] sm:$0xff]
  %v278 = vcombine.high %v272, %v272
  %279 = vrot.lane.b32.xlu0 %v272, 15
  %v280 = vpop.permute.xlu0 %279
  %281 = vrot.lane.b32.xlu0 %v278, 15
  %v282 = vpop.permute.xlu0 %281
  %283 = vrot.lane.b32.xlu0 %v273, 15
  %v284 = vpop.permute.xlu0 %283
  %vm285 = vcmask 121856
  %v286 = vsel %vm285, %v280, %v282
  %v287 = vsel %vm285, %v282, %v284
  %v289 = vsel %vm90, %v275, 0
  %v291 = vsel %vm94, %v286, 0
  %v293 = vsel %vm94, %v287, 0
  %295 = vmatprep.subr.mxu0 %v293
  %296 = vmatpush1.msra.mxu0 %v291
  %297 = vmatprep.subr.mxu0 0.0
  %298 = vmatpush1.msra.mxu0 0.0
  %299 = vmatprep.subr.mxu0 0.0
  %300 = vmatpush1.msra.mxu0 0.0
  %301 = vmatprep.subr.mxu0 0.0
  %302 = vmatpush1.msra.mxu0 0.0
  %303 = vmatprep.subr.mxu0 0.0
  %304 = vmatpush1.msra.mxu0 0.0
  %305 = vmatprep.subr.mxu0 0.0
  %306 = vmatpush1.msra.mxu0 0.0
  %307 = vmatprep.subr.mxu0 0.0
  %308 = vmatpush1.msra.mxu0 0.0
  %309 = vmatprep.subr.mxu0 0.0
  %310 = vmatpush1.msra.mxu0 0.0
  %311 = vmatprep.subr.mxu0 0.0
  %312 = vmatpush1.msra.mxu0 0.0
  %313 = vmatprep.subr.mxu0 0.0
  %314 = vmatpush1.msra.mxu0 0.0
  %315 = vmatprep.subr.mxu0 0.0
  %316 = vmatpush1.msra.mxu0 0.0
  %317 = vmatprep.subr.mxu0 0.0
  %318 = vmatpush1.msra.mxu0 0.0
  %319 = vmatprep.subr.mxu0 0.0
  %320 = vmatpush1.msra.mxu0 0.0
  %321 = vmatprep.subr.mxu0 0.0
  %322 = vmatpush1.msra.mxu0 0.0
  %323 = vmatprep.subr.mxu0 0.0
  %324 = vmatpush1.msra.mxu0 0.0
  %325 = vmatprep.subr.mxu0 0.0
  %326 = vmatpush1.msra.mxu0 0.0
  %327 = vmatprep.subr.mxu0 0.0
  %328 = vmatpush1.msra.mxu0 0.0
  %329 = vmatprep.subr.mxu0 0.0
  %330 = vmatpush1.msra.mxu0 0.0
  %331 = vmatprep.subr.mxu0 0.0
  %332 = vmatpush1.msra.mxu0 0.0
  %333 = vmatprep.subr.mxu0 0.0
  %334 = vmatpush1.msra.mxu0 0.0
  %335 = vmatprep.subr.mxu0 0.0
  %336 = vmatpush1.msra.mxu0 0.0
  %337 = vmatprep.subr.mxu0 0.0
  %338 = vmatpush1.msra.mxu0 0.0
  %339 = vmatprep.subr.mxu0 0.0
  %340 = vmatpush1.msra.mxu0 0.0
  %341 = vmatprep.subr.mxu0 0.0
  %342 = vmatpush1.msra.mxu0 0.0
  %343 = vmatprep.subr.mxu0 0.0
  %344 = vmatpush1.msra.mxu0 0.0
  %345 = vmatprep.subr.mxu0 0.0
  %346 = vmatpush1.msra.mxu0 0.0
  %347 = vmatprep.subr.mxu0 0.0
  %348 = vmatpush1.msra.mxu0 0.0
  %349 = vmatprep.subr.mxu0 0.0
  %350 = vmatpush1.msra.mxu0 0.0
  %351 = vmatprep.subr.mxu0 0.0
  %352 = vmatpush1.msra.mxu0 0.0
  %353 = vmatprep.subr.mxu0 0.0
  %354 = vmatpush1.msra.mxu0 0.0
  %355 = vmatprep.subr.mxu0 0.0
  %356 = vmatpush1.msra.mxu0 0.0
  %357 = vmatprep.subr.mxu0 0.0
  %358 = vmatpush1.msra.mxu0 0.0
  %359 = vmatprep.mubr.f32.mxu0 0.0
  %360 = vmatmul.mubr.f32.gmra.mrb[0].mxu0 %v289
  %v361 = vpop.f32.mrb[0].mxu0
  %v362 = vadd.f32 0.0, %v361
  %v363 = vpop.f32.mrb[0].mxu0
  %v364 = vadd.f32 0.0, %v363
  %365 = vdwg.mxu0
  %v366 = vadd.f32 %v256, %v362
  %v367 = vadd.f32 %v258, %v364
  %v368 = vld [vmem:[#allocation2] sm:$0xff]
  %v369 = vld [vmem:[#allocation2 + $0x8] sm:$0xf]
  %370 = vrot.lane.b32.xlu0 %v65, 127
  %v371 = vpop.permute.xlu0 %370
  %v372 = vrot.slane %v371, 4
  %vm373 = vcmask 1039360
  %v374 = vsel %vm373, %v372, %v371
  %v377 = vmul.f32 %v368, %v374
  %v378 = vmul.f32 %v369, %v372
  %s379 = scalar_lea.vmem %s1, 24
  %v380 = vld [vmem:[%s379] sm:$0xff]
  %v383 = vcombine.high %v377, %v377
  %384 = vrot.lane.b32.xlu0 %v377, 1
  %v385 = vpop.permute.xlu0 %384
  %386 = vrot.lane.b32.xlu0 %v383, 1
  %v387 = vpop.permute.xlu0 %386
  %388 = vrot.lane.b32.xlu0 %v378, 1
  %v389 = vpop.permute.xlu0 %388
  %vm390 = vcmask 7168
  %v391 = vsel %vm390, %v385, %v387
  %v392 = vsel %vm390, %v387, %v389
  %v394 = vsel %vm90, %v380, 0
  %v396 = vsel %vm94, %v391, 0
  %v398 = vsel %vm94, %v392, 0
  %400 = vmatprep.subr.mxu0 %v398
  %401 = vmatpush1.msra.mxu0 %v396
  %402 = vmatprep.subr.mxu0 0.0
  %403 = vmatpush1.msra.mxu0 0.0
  %404 = vmatprep.subr.mxu0 0.0
  %405 = vmatpush1.msra.mxu0 0.0
  %406 = vmatprep.subr.mxu0 0.0
  %407 = vmatpush1.msra.mxu0 0.0
  %408 = vmatprep.subr.mxu0 0.0
  %409 = vmatpush1.msra.mxu0 0.0
  %410 = vmatprep.subr.mxu0 0.0
  %411 = vmatpush1.msra.mxu0 0.0
  %412 = vmatprep.subr.mxu0 0.0
  %413 = vmatpush1.msra.mxu0 0.0
  %414 = vmatprep.subr.mxu0 0.0
  %415 = vmatpush1.msra.mxu0 0.0
  %416 = vmatprep.subr.mxu0 0.0
  %417 = vmatpush1.msra.mxu0 0.0
  %418 = vmatprep.subr.mxu0 0.0
  %419 = vmatpush1.msra.mxu0 0.0
  %420 = vmatprep.subr.mxu0 0.0
  %421 = vmatpush1.msra.mxu0 0.0
  %422 = vmatprep.subr.mxu0 0.0
  %423 = vmatpush1.msra.mxu0 0.0
  %424 = vmatprep.subr.mxu0 0.0
  %425 = vmatpush1.msra.mxu0 0.0
  %426 = vmatprep.subr.mxu0 0.0
  %427 = vmatpush1.msra.mxu0 0.0
  %428 = vmatprep.subr.mxu0 0.0
  %429 = vmatpush1.msra.mxu0 0.0
  %430 = vmatprep.subr.mxu0 0.0
  %431 = vmatpush1.msra.mxu0 0.0
  %432 = vmatprep.subr.mxu0 0.0
  %433 = vmatpush1.msra.mxu0 0.0
  %434 = vmatprep.subr.mxu0 0.0
  %435 = vmatpush1.msra.mxu0 0.0
  %436 = vmatprep.subr.mxu0 0.0
  %437 = vmatpush1.msra.mxu0 0.0
  %438 = vmatprep.subr.mxu0 0.0
  %439 = vmatpush1.msra.mxu0 0.0
  %440 = vmatprep.subr.mxu0 0.0
  %441 = vmatpush1.msra.mxu0 0.0
  %442 = vmatprep.subr.mxu0 0.0
  %443 = vmatpush1.msra.mxu0 0.0
  %444 = vmatprep.subr.mxu0 0.0
  %445 = vmatpush1.msra.mxu0 0.0
  %446 = vmatprep.subr.mxu0 0.0
  %447 = vmatpush1.msra.mxu0 0.0
  %448 = vmatprep.subr.mxu0 0.0
  %449 = vmatpush1.msra.mxu0 0.0
  %450 = vmatprep.subr.mxu0 0.0
  %451 = vmatpush1.msra.mxu0 0.0
  %452 = vmatprep.subr.mxu0 0.0
  %453 = vmatpush1.msra.mxu0 0.0
  %454 = vmatprep.subr.mxu0 0.0
  %455 = vmatpush1.msra.mxu0 0.0
  %456 = vmatprep.subr.mxu0 0.0
  %457 = vmatpush1.msra.mxu0 0.0
  %458 = vmatprep.subr.mxu0 0.0
  %459 = vmatpush1.msra.mxu0 0.0
  %460 = vmatprep.subr.mxu0 0.0
  %461 = vmatpush1.msra.mxu0 0.0
  %462 = vmatprep.subr.mxu0 0.0
  %463 = vmatpush1.msra.mxu0 0.0
  %464 = vmatprep.mubr.f32.mxu0 0.0
  %465 = vmatmul.mubr.f32.gmra.mrb[0].mxu0 %v394
  %v466 = vpop.f32.mrb[0].mxu0
  %v467 = vadd.f32 0.0, %v466
  %v468 = vpop.f32.mrb[0].mxu0
  %v469 = vadd.f32 0.0, %v468
  %470 = vdwg.mxu0
  %v471 = vadd.f32 %v366, %v467
  %v472 = vadd.f32 %v367, %v469
  %v473 = vld [vmem:[#allocation2 + $0x4] sm:$0xff]
  %s474 = scalar_lea.vmem %s1, 32
  %v475 = vld [vmem:[%s474] sm:$0xff]
  %v477 = vcombine.high %v473, %v473
  %v479 = vsel %vm90, %v475, 0
  %v481 = vsel %vm94, %v473, 0
  %v483 = vsel %vm94, %v477, 0
  %485 = vmatprep.subr.mxu0 %v483
  %486 = vmatpush1.msra.mxu0 %v481
  %487 = vmatprep.subr.mxu0 0.0
  %488 = vmatpush1.msra.mxu0 0.0
  %489 = vmatprep.subr.mxu0 0.0
  %490 = vmatpush1.msra.mxu0 0.0
  %491 = vmatprep.subr.mxu0 0.0
  %492 = vmatpush1.msra.mxu0 0.0
  %493 = vmatprep.subr.mxu0 0.0
  %494 = vmatpush1.msra.mxu0 0.0
  %495 = vmatprep.subr.mxu0 0.0
  %496 = vmatpush1.msra.mxu0 0.0
  %497 = vmatprep.subr.mxu0 0.0
  %498 = vmatpush1.msra.mxu0 0.0
  %499 = vmatprep.subr.mxu0 0.0
  %500 = vmatpush1.msra.mxu0 0.0
  %501 = vmatprep.subr.mxu0 0.0
  %502 = vmatpush1.msra.mxu0 0.0
  %503 = vmatprep.subr.mxu0 0.0
  %504 = vmatpush1.msra.mxu0 0.0
  %505 = vmatprep.subr.mxu0 0.0
  %506 = vmatpush1.msra.mxu0 0.0
  %507 = vmatprep.subr.mxu0 0.0
  %508 = vmatpush1.msra.mxu0 0.0
  %509 = vmatprep.subr.mxu0 0.0
  %510 = vmatpush1.msra.mxu0 0.0
  %511 = vmatprep.subr.mxu0 0.0
  %512 = vmatpush1.msra.mxu0 0.0
  %513 = vmatprep.subr.mxu0 0.0
  %514 = vmatpush1.msra.mxu0 0.0
  %515 = vmatprep.subr.mxu0 0.0
  %516 = vmatpush1.msra.mxu0 0.0
  %517 = vmatprep.subr.mxu0 0.0
  %518 = vmatpush1.msra.mxu0 0.0
  %519 = vmatprep.subr.mxu0 0.0
  %520 = vmatpush1.msra.mxu0 0.0
  %521 = vmatprep.subr.mxu0 0.0
  %522 = vmatpush1.msra.mxu0 0.0
  %523 = vmatprep.subr.mxu0 0.0
  %524 = vmatpush1.msra.mxu0 0.0
  %525 = vmatprep.subr.mxu0 0.0
  %526 = vmatpush1.msra.mxu0 0.0
  %527 = vmatprep.subr.mxu0 0.0
  %528 = vmatpush1.msra.mxu0 0.0
  %529 = vmatprep.subr.mxu0 0.0
  %530 = vmatpush1.msra.mxu0 0.0
  %531 = vmatprep.subr.mxu0 0.0
  %532 = vmatpush1.msra.mxu0 0.0
  %533 = vmatprep.subr.mxu0 0.0
  %534 = vmatpush1.msra.mxu0 0.0
  %535 = vmatprep.subr.mxu0 0.0
  %536 = vmatpush1.msra.mxu0 0.0
  %537 = vmatprep.subr.mxu0 0.0
  %538 = vmatpush1.msra.mxu0 0.0
  %539 = vmatprep.subr.mxu0 0.0
  %540 = vmatpush1.msra.mxu0 0.0
  %541 = vmatprep.subr.mxu0 0.0
  %542 = vmatpush1.msra.mxu0 0.0
  %543 = vmatprep.subr.mxu0 0.0
  %544 = vmatpush1.msra.mxu0 0.0
  %545 = vmatprep.subr.mxu0 0.0
  %546 = vmatpush1.msra.mxu0 0.0
  %547 = vmatprep.subr.mxu0 0.0
  %548 = vmatpush1.msra.mxu0 0.0
  %549 = vmatprep.mubr.f32.mxu0 0.0
  %550 = vmatmul.mubr.f32.gmra.mrb[0].mxu0 %v479
  %v551 = vpop.f32.mrb[0].mxu0
  %v552 = vadd.f32 0.0, %v551
  %v553 = vpop.f32.mrb[0].mxu0
  %v554 = vadd.f32 0.0, %v553
  %555 = vdwg.mxu0
  %v556 = vadd.f32 %v471, %v552
  %v557 = vadd.f32 %v472, %v554
  %v558 = vld [vmem:[#allocation2 + $0x4] sm:$0xff]
  %v559 = vld [vmem:[#allocation2 + $0xc] sm:$0xf]
  %560 = vrot.lane.b32.xlu0 %v264, 1
  %v561 = vpop.permute.xlu0 %560
  %v562 = vrot.slane %v561, 4
  %v563 = vsel %vm390, %v562, %v561
  %v566 = vmul.f32 %v558, %v563
  %v567 = vmul.f32 %v559, %v562
  %s568 = scalar_lea.vmem %s1, 40
  %v569 = vld [vmem:[%s568] sm:$0xff]
  %v572 = vcombine.high %v566, %v566
  %573 = vrot.lane.b32.xlu0 %v566, 127
  %v574 = vpop.permute.xlu0 %573
  %575 = vrot.lane.b32.xlu0 %v572, 127
  %v576 = vpop.permute.xlu0 %575
  %577 = vrot.lane.b32.xlu0 %v567, 127
  %v578 = vpop.permute.xlu0 %577
  %v579 = vsel %vm373, %v574, %v576
  %v580 = vsel %vm373, %v576, %v578
  %v582 = vsel %vm90, %v569, 0
  %v584 = vsel %vm94, %v579, 0
  %v586 = vsel %vm94, %v580, 0
  %588 = vmatprep.subr.mxu0 %v586
  %589 = vmatpush1.msra.mxu0 %v584
  %590 = vmatprep.subr.mxu0 0.0
  %591 = vmatpush1.msra.mxu0 0.0
  %592 = vmatprep.subr.mxu0 0.0
  %593 = vmatpush1.msra.mxu0 0.0
  %594 = vmatprep.subr.mxu0 0.0
  %595 = vmatpush1.msra.mxu0 0.0
  %596 = vmatprep.subr.mxu0 0.0
  %597 = vmatpush1.msra.mxu0 0.0
  %598 = vmatprep.subr.mxu0 0.0
  %599 = vmatpush1.msra.mxu0 0.0
  %600 = vmatprep.subr.mxu0 0.0
  %601 = vmatpush1.msra.mxu0 0.0
  %602 = vmatprep.subr.mxu0 0.0
  %603 = vmatpush1.msra.mxu0 0.0
  %604 = vmatprep.subr.mxu0 0.0
  %605 = vmatpush1.msra.mxu0 0.0
  %606 = vmatprep.subr.mxu0 0.0
  %607 = vmatpush1.msra.mxu0 0.0
  %608 = vmatprep.subr.mxu0 0.0
  %609 = vmatpush1.msra.mxu0 0.0
  %610 = vmatprep.subr.mxu0 0.0
  %611 = vmatpush1.msra.mxu0 0.0
  %612 = vmatprep.subr.mxu0 0.0
  %613 = vmatpush1.msra.mxu0 0.0
  %614 = vmatprep.subr.mxu0 0.0
  %615 = vmatpush1.msra.mxu0 0.0
  %616 = vmatprep.subr.mxu0 0.0
  %617 = vmatpush1.msra.mxu0 0.0
  %618 = vmatprep.subr.mxu0 0.0
  %619 = vmatpush1.msra.mxu0 0.0
  %620 = vmatprep.subr.mxu0 0.0
  %621 = vmatpush1.msra.mxu0 0.0
  %622 = vmatprep.subr.mxu0 0.0
  %623 = vmatpush1.msra.mxu0 0.0
  %624 = vmatprep.subr.mxu0 0.0
  %625 = vmatpush1.msra.mxu0 0.0
  %626 = vmatprep.subr.mxu0 0.0
  %627 = vmatpush1.msra.mxu0 0.0
  %628 = vmatprep.subr.mxu0 0.0
  %629 = vmatpush1.msra.mxu0 0.0
  %630 = vmatprep.subr.mxu0 0.0
  %631 = vmatpush1.msra.mxu0 0.0
  %632 = vmatprep.subr.mxu0 0.0
  %633 = vmatpush1.msra.mxu0 0.0
  %634 = vmatprep.subr.mxu0 0.0
  %635 = vmatpush1.msra.mxu0 0.0
  %636 = vmatprep.subr.mxu0 0.0
  %637 = vmatpush1.msra.mxu0 0.0
  %638 = vmatprep.subr.mxu0 0.0
  %639 = vmatpush1.msra.mxu0 0.0
  %640 = vmatprep.subr.mxu0 0.0
  %641 = vmatpush1.msra.mxu0 0.0
  %642 = vmatprep.subr.mxu0 0.0
  %643 = vmatpush1.msra.mxu0 0.0
  %644 = vmatprep.subr.mxu0 0.0
  %645 = vmatpush1.msra.mxu0 0.0
  %646 = vmatprep.subr.mxu0 0.0
  %647 = vmatpush1.msra.mxu0 0.0
  %648 = vmatprep.subr.mxu0 0.0
  %649 = vmatpush1.msra.mxu0 0.0
  %650 = vmatprep.subr.mxu0 0.0
  %651 = vmatpush1.msra.mxu0 0.0
  %652 = vmatprep.mubr.f32.mxu0 0.0
  %653 = vmatmul.mubr.f32.gmra.mrb[0].mxu0 %v582
  %v654 = vpop.f32.mrb[0].mxu0
  %v655 = vadd.f32 0.0, %v654
  %v656 = vpop.f32.mrb[0].mxu0
  %v657 = vadd.f32 0.0, %v656
  %658 = vdwg.mxu0
  %v659 = vadd.f32 %v556, %v655
  %v660 = vadd.f32 %v557, %v657
  %v661 = vld [vmem:[#allocation2 + $0x4] sm:$0xff]
  %v662 = vld [vmem:[#allocation2 + $0xc] sm:$0xf]
  %663 = vrot.lane.b32.xlu0 %v65, 15
  %v664 = vpop.permute.xlu0 %663
  %v665 = vrot.slane %v664, 4
  %v666 = vsel %vm285, %v665, %v664
  %v669 = vmul.f32 %v661, %v666
  %v670 = vmul.f32 %v662, %v665
  %s671 = scalar_lea.vmem %s1, 48
  %v672 = vld [vmem:[%s671] sm:$0xff]
  %v675 = vcombine.high %v669, %v669
  %676 = vrot.lane.b32.xlu0 %v669, 113
  %v677 = vpop.permute.xlu0 %676
  %678 = vrot.lane.b32.xlu0 %v675, 113
  %v679 = vpop.permute.xlu0 %678
  %680 = vrot.lane.b32.xlu0 %v670, 113
  %v681 = vpop.permute.xlu0 %680
  %v682 = vsel %vm268, %v677, %v679
  %v683 = vsel %vm268, %v679, %v681
  %v685 = vsel %vm90, %v672, 0
  %v687 = vsel %vm94, %v682, 0
  %v689 = vsel %vm94, %v683, 0
  %691 = vmatprep.subr.mxu0 %v689
  %692 = vmatpush1.msra.mxu0 %v687
  %693 = vmatprep.subr.mxu0 0.0
  %694 = vmatpush1.msra.mxu0 0.0
  %695 = vmatprep.subr.mxu0 0.0
  %696 = vmatpush1.msra.mxu0 0.0
  %697 = vmatprep.subr.mxu0 0.0
  %698 = vmatpush1.msra.mxu0 0.0
  %699 = vmatprep.subr.mxu0 0.0
  %700 = vmatpush1.msra.mxu0 0.0
  %701 = vmatprep.subr.mxu0 0.0
  %702 = vmatpush1.msra.mxu0 0.0
  %703 = vmatprep.subr.mxu0 0.0
  %704 = vmatpush1.msra.mxu0 0.0
  %705 = vmatprep.subr.mxu0 0.0
  %706 = vmatpush1.msra.mxu0 0.0
  %707 = vmatprep.subr.mxu0 0.0
  %708 = vmatpush1.msra.mxu0 0.0
  %709 = vmatprep.subr.mxu0 0.0
  %710 = vmatpush1.msra.mxu0 0.0
  %711 = vmatprep.subr.mxu0 0.0
  %712 = vmatpush1.msra.mxu0 0.0
  %713 = vmatprep.subr.mxu0 0.0
  %714 = vmatpush1.msra.mxu0 0.0
  %715 = vmatprep.subr.mxu0 0.0
  %716 = vmatpush1.msra.mxu0 0.0
  %717 = vmatprep.subr.mxu0 0.0
  %718 = vmatpush1.msra.mxu0 0.0
  %719 = vmatprep.subr.mxu0 0.0
  %720 = vmatpush1.msra.mxu0 0.0
  %721 = vmatprep.subr.mxu0 0.0
  %722 = vmatpush1.msra.mxu0 0.0
  %723 = vmatprep.subr.mxu0 0.0
  %724 = vmatpush1.msra.mxu0 0.0
  %725 = vmatprep.subr.mxu0 0.0
  %726 = vmatpush1.msra.mxu0 0.0
  %727 = vmatprep.subr.mxu0 0.0
  %728 = vmatpush1.msra.mxu0 0.0
  %729 = vmatprep.subr.mxu0 0.0
  %730 = vmatpush1.msra.mxu0 0.0
  %731 = vmatprep.subr.mxu0 0.0
  %732 = vmatpush1.msra.mxu0 0.0
  %733 = vmatprep.subr.mxu0 0.0
  %734 = vmatpush1.msra.mxu0 0.0
  %735 = vmatprep.subr.mxu0 0.0
  %736 = vmatpush1.msra.mxu0 0.0
  %737 = vmatprep.subr.mxu0 0.0
  %738 = vmatpush1.msra.mxu0 0.0
  %739 = vmatprep.subr.mxu0 0.0
  %740 = vmatpush1.msra.mxu0 0.0
  %741 = vmatprep.subr.mxu0 0.0
  %742 = vmatpush1.msra.mxu0 0.0
  %743 = vmatprep.subr.mxu0 0.0
  %744 = vmatpush1.msra.mxu0 0.0
  %745 = vmatprep.subr.mxu0 0.0
  %746 = vmatpush1.msra.mxu0 0.0
  %747 = vmatprep.subr.mxu0 0.0
  %748 = vmatpush1.msra.mxu0 0.0
  %749 = vmatprep.subr.mxu0 0.0
  %750 = vmatpush1.msra.mxu0 0.0
  %751 = vmatprep.subr.mxu0 0.0
  %752 = vmatpush1.msra.mxu0 0.0
  %753 = vmatprep.subr.mxu0 0.0
  %754 = vmatpush1.msra.mxu0 0.0
  %755 = vmatprep.mubr.f32.mxu0 0.0
  %756 = vmatmul.mubr.f32.gmra.mrb[0].mxu0 %v685
  %v757 = vpop.f32.mrb[0].mxu0
  %v758 = vadd.f32 0.0, %v757
  %v759 = vpop.f32.mrb[0].mxu0
  %v760 = vadd.f32 0.0, %v759
  %761 = vdwg.mxu0
  %v762 = vadd.f32 %v659, %v758
  %v763 = vadd.f32 %v660, %v760
  %v764 = vld [vmem:[#allocation2 + $0x4] sm:$0xff]
  %v765 = vld [vmem:[#allocation2 + $0xc] sm:$0xf]
  %s766 = scalar_lea.vmem %s1, 56
  %v767 = vld [vmem:[%s766] sm:$0xff]
  %v770 = vcombine.high %v764, %v764
  %771 = vrot.lane.b32.xlu0 %v764, 112
  %v772 = vpop.permute.xlu0 %771
  %773 = vrot.lane.b32.xlu0 %v770, 112
  %v774 = vpop.permute.xlu0 %773
  %775 = vrot.lane.b32.xlu0 %v765, 112
  %v776 = vpop.permute.xlu0 %775
  %vm777 = vcmask 916480
  %v778 = vsel %vm777, %v772, %v774
  %v779 = vsel %vm777, %v774, %v776
  %v781 = vsel %vm90, %v767, 0
  %v783 = vsel %vm94, %v778, 0
  %v785 = vsel %vm94, %v779, 0
  %787 = vmatprep.subr.mxu0 %v785
  %788 = vmatpush1.msra.mxu0 %v783
  %789 = vmatprep.subr.mxu0 0.0
  %790 = vmatpush1.msra.mxu0 0.0
  %791 = vmatprep.subr.mxu0 0.0
  %792 = vmatpush1.msra.mxu0 0.0
  %793 = vmatprep.subr.mxu0 0.0
  %794 = vmatpush1.msra.mxu0 0.0
  %795 = vmatprep.subr.mxu0 0.0
  %796 = vmatpush1.msra.mxu0 0.0
  %797 = vmatprep.subr.mxu0 0.0
  %798 = vmatpush1.msra.mxu0 0.0
  %799 = vmatprep.subr.mxu0 0.0
  %800 = vmatpush1.msra.mxu0 0.0
  %801 = vmatprep.subr.mxu0 0.0
  %802 = vmatpush1.msra.mxu0 0.0
  %803 = vmatprep.subr.mxu0 0.0
  %804 = vmatpush1.msra.mxu0 0.0
  %805 = vmatprep.subr.mxu0 0.0
  %806 = vmatpush1.msra.mxu0 0.0
  %807 = vmatprep.subr.mxu0 0.0
  %808 = vmatpush1.msra.mxu0 0.0
  %809 = vmatprep.subr.mxu0 0.0
  %810 = vmatpush1.msra.mxu0 0.0
  %811 = vmatprep.subr.mxu0 0.0
  %812 = vmatpush1.msra.mxu0 0.0
  %813 = vmatprep.subr.mxu0 0.0
  %814 = vmatpush1.msra.mxu0 0.0
  %815 = vmatprep.subr.mxu0 0.0
  %816 = vmatpush1.msra.mxu0 0.0
  %817 = vmatprep.subr.mxu0 0.0
  %818 = vmatpush1.msra.mxu0 0.0
  %819 = vmatprep.subr.mxu0 0.0
  %820 = vmatpush1.msra.mxu0 0.0
  %821 = vmatprep.subr.mxu0 0.0
  %822 = vmatpush1.msra.mxu0 0.0
  %823 = vmatprep.subr.mxu0 0.0
  %824 = vmatpush1.msra.mxu0 0.0
  %825 = vmatprep.subr.mxu0 0.0
  %826 = vmatpush1.msra.mxu0 0.0
  %827 = vmatprep.subr.mxu0 0.0
  %828 = vmatpush1.msra.mxu0 0.0
  %829 = vmatprep.subr.mxu0 0.0
  %830 = vmatpush1.msra.mxu0 0.0
  %831 = vmatprep.subr.mxu0 0.0
  %832 = vmatpush1.msra.mxu0 0.0
  %833 = vmatprep.subr.mxu0 0.0
  %834 = vmatpush1.msra.mxu0 0.0
  %835 = vmatprep.subr.mxu0 0.0
  %836 = vmatpush1.msra.mxu0 0.0
  %837 = vmatprep.subr.mxu0 0.0
  %838 = vmatpush1.msra.mxu0 0.0
  %839 = vmatprep.subr.mxu0 0.0
  %840 = vmatpush1.msra.mxu0 0.0
  %841 = vmatprep.subr.mxu0 0.0
  %842 = vmatpush1.msra.mxu0 0.0
  %843 = vmatprep.subr.mxu0 0.0
  %844 = vmatpush1.msra.mxu0 0.0
  %845 = vmatprep.subr.mxu0 0.0
  %846 = vmatpush1.msra.mxu0 0.0
  %847 = vmatprep.subr.mxu0 0.0
  %848 = vmatpush1.msra.mxu0 0.0
  %849 = vmatprep.subr.mxu0 0.0
  %850 = vmatpush1.msra.mxu0 0.0
  %851 = vmatprep.mubr.f32.mxu0 0.0
  %852 = vmatmul.mubr.f32.gmra.mrb[0].mxu0 %v781
  %v853 = vpop.f32.mrb[0].mxu0
  %v854 = vadd.f32 0.0, %v853
  %v855 = vpop.f32.mrb[0].mxu0
  %v856 = vadd.f32 0.0, %v855
  %857 = vdwg.mxu0
  %v858 = vadd.f32 %v762, %v854
  %v859 = vadd.f32 %v763, %v856
  %v860 = vld [vmem:[#allocation2 + $0x4] sm:$0xff]
  %v861 = vld [vmem:[#allocation2 + $0xc] sm:$0xf]
  %862 = vrot.lane.b32.xlu0 %v264, 17
  %v863 = vpop.permute.xlu0 %862
  %v864 = vrot.slane %v863, 4
  %v865 = vsel %vm179, %v864, %v863
  %v868 = vmul.f32 %v860, %v865
  %v869 = vmul.f32 %v861, %v864
  %s870 = scalar_lea.vmem %s1, 64
  %v871 = vld [vmem:[%s870] sm:$0xff]
  %v874 = vcombine.high %v868, %v868
  %875 = vrot.lane.b32.xlu0 %v868, 111
  %v876 = vpop.permute.xlu0 %875
  %877 = vrot.lane.b32.xlu0 %v874, 111
  %v878 = vpop.permute.xlu0 %877
  %879 = vrot.lane.b32.xlu0 %v869, 111
  %v880 = vpop.permute.xlu0 %879
  %v881 = vsel %vm69, %v876, %v878
  %v882 = vsel %vm69, %v878, %v880
  %v884 = vsel %vm90, %v871, 0
  %v886 = vsel %vm94, %v881, 0
  %v888 = vsel %vm94, %v882, 0
  %890 = vmatprep.subr.mxu0 %v888
  %891 = vmatpush1.msra.mxu0 %v886
  %892 = vmatprep.subr.mxu0 0.0
  %893 = vmatpush1.msra.mxu0 0.0
  %894 = vmatprep.subr.mxu0 0.0
  %895 = vmatpush1.msra.mxu0 0.0
  %896 = vmatprep.subr.mxu0 0.0
  %897 = vmatpush1.msra.mxu0 0.0
  %898 = vmatprep.subr.mxu0 0.0
  %899 = vmatpush1.msra.mxu0 0.0
  %900 = vmatprep.subr.mxu0 0.0
  %901 = vmatpush1.msra.mxu0 0.0
  %902 = vmatprep.subr.mxu0 0.0
  %903 = vmatpush1.msra.mxu0 0.0
  %904 = vmatprep.subr.mxu0 0.0
  %905 = vmatpush1.msra.mxu0 0.0
  %906 = vmatprep.subr.mxu0 0.0
  %907 = vmatpush1.msra.mxu0 0.0
  %908 = vmatprep.subr.mxu0 0.0
  %909 = vmatpush1.msra.mxu0 0.0
  %910 = vmatprep.subr.mxu0 0.0
  %911 = vmatpush1.msra.mxu0 0.0
  %912 = vmatprep.subr.mxu0 0.0
  %913 = vmatpush1.msra.mxu0 0.0
  %914 = vmatprep.subr.mxu0 0.0
  %915 = vmatpush1.msra.mxu0 0.0
  %916 = vmatprep.subr.mxu0 0.0
  %917 = vmatpush1.msra.mxu0 0.0
  %918 = vmatprep.subr.mxu0 0.0
  %919 = vmatpush1.msra.mxu0 0.0
  %920 = vmatprep.subr.mxu0 0.0
  %921 = vmatpush1.msra.mxu0 0.0
  %922 = vmatprep.subr.mxu0 0.0
  %923 = vmatpush1.msra.mxu0 0.0
  %924 = vmatprep.subr.mxu0 0.0
  %925 = vmatpush1.msra.mxu0 0.0
  %926 = vmatprep.subr.mxu0 0.0
  %927 = vmatpush1.msra.mxu0 0.0
  %928 = vmatprep.subr.mxu0 0.0
  %929 = vmatpush1.msra.mxu0 0.0
  %930 = vmatprep.subr.mxu0 0.0
  %931 = vmatpush1.msra.mxu0 0.0
  %932 = vmatprep.subr.mxu0 0.0
  %933 = vmatpush1.msra.mxu0 0.0
  %934 = vmatprep.subr.mxu0 0.0
  %935 = vmatpush1.msra.mxu0 0.0
  %936 = vmatprep.subr.mxu0 0.0
  %937 = vmatpush1.msra.mxu0 0.0
  %938 = vmatprep.subr.mxu0 0.0
  %939 = vmatpush1.msra.mxu0 0.0
  %940 = vmatprep.subr.mxu0 0.0
  %941 = vmatpush1.msra.mxu0 0.0
  %942 = vmatprep.subr.mxu0 0.0
  %943 = vmatpush1.msra.mxu0 0.0
  %944 = vmatprep.subr.mxu0 0.0
  %945 = vmatpush1.msra.mxu0 0.0
  %946 = vmatprep.subr.mxu0 0.0
  %947 = vmatpush1.msra.mxu0 0.0
  %948 = vmatprep.subr.mxu0 0.0
  %949 = vmatpush1.msra.mxu0 0.0
  %950 = vmatprep.subr.mxu0 0.0
  %951 = vmatpush1.msra.mxu0 0.0
  %952 = vmatprep.subr.mxu0 0.0
  %953 = vmatpush1.msra.mxu0 0.0
  %954 = vmatprep.mubr.f32.mxu0 0.0
  %955 = vmatmul.mubr.f32.gmra.mrb[0].mxu0 %v884
  %v956 = vpop.f32.mrb[0].mxu0
  %v957 = vadd.f32 0.0, %v956
  %v958 = vpop.f32.mrb[0].mxu0
  %v959 = vadd.f32 0.0, %v958
  %960 = vdwg.mxu0
  %v961 = vadd.f32 %v858, %v957
  %v962 = vadd.f32 %v859, %v959
  %s963 = scalar_lea.vmem [#allocation2], 16
  %v964 = vld [vmem:[%s963] sm:$0xff]
  %v965 = vld [vmem:[%s963 + $0x8] sm:$0xf]
  %v966 = vmul.f32 %v964, %v70
  %v967 = vmul.f32 %v965, %v68
  %v970 = vcombine.high %v964, %v964
  %971 = vrot.lane.b32.xlu0 %v964, 16
  %v972 = vpop.permute.xlu0 %971
  %973 = vrot.lane.b32.xlu0 %v970, 16
  %v974 = vpop.permute.xlu0 %973
  %975 = vrot.lane.b32.xlu0 %v965, 16
  %v976 = vpop.permute.xlu0 %975
  %v977 = vsel %vm87, %v972, %v974
  %v978 = vsel %vm87, %v974, %v976
  %v979 = vsel %vm94, %v977, 0
  %v981 = vsel %vm94, %v978, 0
  %983 = vmatprep.subr.mxu0 %v981
  %984 = vmatpush1.msra.mxu0 %v979
  %985 = vmatprep.subr.mxu0 0.0
  %986 = vmatpush1.msra.mxu0 0.0
  %987 = vmatprep.subr.mxu0 0.0
  %988 = vmatpush1.msra.mxu0 0.0
  %989 = vmatprep.subr.mxu0 0.0
  %990 = vmatpush1.msra.mxu0 0.0
  %991 = vmatprep.subr.mxu0 0.0
  %992 = vmatpush1.msra.mxu0 0.0
  %993 = vmatprep.subr.mxu0 0.0
  %994 = vmatpush1.msra.mxu0 0.0
  %995 = vmatprep.subr.mxu0 0.0
  %996 = vmatpush1.msra.mxu0 0.0
  %997 = vmatprep.subr.mxu0 0.0
  %998 = vmatpush1.msra.mxu0 0.0
  %999 = vmatprep.subr.mxu0 0.0
  %1000 = vmatpush1.msra.mxu0 0.0
  %1001 = vmatprep.subr.mxu0 0.0
  %1002 = vmatpush1.msra.mxu0 0.0
  %1003 = vmatprep.subr.mxu0 0.0
  %1004 = vmatpush1.msra.mxu0 0.0
  %1005 = vmatprep.subr.mxu0 0.0
  %1006 = vmatpush1.msra.mxu0 0.0
  %1007 = vmatprep.subr.mxu0 0.0
  %1008 = vmatpush1.msra.mxu0 0.0
  %1009 = vmatprep.subr.mxu0 0.0
  %1010 = vmatpush1.msra.mxu0 0.0
  %1011 = vmatprep.subr.mxu0 0.0
  %1012 = vmatpush1.msra.mxu0 0.0
  %1013 = vmatprep.subr.mxu0 0.0
  %1014 = vmatpush1.msra.mxu0 0.0
  %1015 = vmatprep.subr.mxu0 0.0
  %1016 = vmatpush1.msra.mxu0 0.0
  %1017 = vmatprep.subr.mxu0 0.0
  %1018 = vmatpush1.msra.mxu0 0.0
  %1019 = vmatprep.subr.mxu0 0.0
  %1020 = vmatpush1.msra.mxu0 0.0
  %1021 = vmatprep.subr.mxu0 0.0
  %1022 = vmatpush1.msra.mxu0 0.0
  %1023 = vmatprep.subr.mxu0 0.0
  %1024 = vmatpush1.msra.mxu0 0.0
  %1025 = vmatprep.subr.mxu0 0.0
  %1026 = vmatpush1.msra.mxu0 0.0
  %1027 = vmatprep.subr.mxu0 0.0
  %1028 = vmatpush1.msra.mxu0 0.0
  %1029 = vmatprep.subr.mxu0 0.0
  %1030 = vmatpush1.msra.mxu0 0.0
  %1031 = vmatprep.subr.mxu0 0.0
  %1032 = vmatpush1.msra.mxu0 0.0
  %1033 = vmatprep.subr.mxu0 0.0
  %1034 = vmatpush1.msra.mxu0 0.0
  %1035 = vmatprep.subr.mxu0 0.0
  %1036 = vmatpush1.msra.mxu0 0.0
  %1037 = vmatprep.subr.mxu0 0.0
  %1038 = vmatpush1.msra.mxu0 0.0
  %1039 = vmatprep.subr.mxu0 0.0
  %1040 = vmatpush1.msra.mxu0 0.0
  %1041 = vmatprep.subr.mxu0 0.0
  %1042 = vmatpush1.msra.mxu0 0.0
  %1043 = vmatprep.subr.mxu0 0.0
  %1044 = vmatpush1.msra.mxu0 0.0
  %1045 = vmatprep.subr.mxu0 0.0
  %1046 = vmatpush1.msra.mxu0 0.0
  %1047 = vmatprep.mubr.f32.mxu0 0.0
  %1048 = vmatmul.mubr.f32.gmra.mrb[0].mxu0 %v92
  %v1049 = vpop.f32.mrb[0].mxu0
  %v1050 = vadd.f32 0.0, %v1049
  %v1051 = vpop.f32.mrb[0].mxu0
  %v1052 = vadd.f32 0.0, %v1051
  %1053 = vdwg.mxu0
  %v1056 = vcombine.high %v966, %v966
  %1057 = vrot.lane.b32.xlu0 %v966, 17
  %v1058 = vpop.permute.xlu0 %1057
  %1059 = vrot.lane.b32.xlu0 %v1056, 17
  %v1060 = vpop.permute.xlu0 %1059
  %1061 = vrot.lane.b32.xlu0 %v967, 17
  %v1062 = vpop.permute.xlu0 %1061
  %v1063 = vsel %vm179, %v1058, %v1060
  %v1064 = vsel %vm179, %v1060, %v1062
  %v1065 = vsel %vm94, %v1063, 0
  %v1067 = vsel %vm94, %v1064, 0
  %1069 = vmatprep.subr.mxu0 %v1067
  %1070 = vmatpush1.msra.mxu0 %v1065
  %1071 = vmatprep.subr.mxu0 0.0
  %1072 = vmatpush1.msra.mxu0 0.0
  %1073 = vmatprep.subr.mxu0 0.0
  %1074 = vmatpush1.msra.mxu0 0.0
  %1075 = vmatprep.subr.mxu0 0.0
  %1076 = vmatpush1.msra.mxu0 0.0
  %1077 = vmatprep.subr.mxu0 0.0
  %1078 = vmatpush1.msra.mxu0 0.0
  %1079 = vmatprep.subr.mxu0 0.0
  %1080 = vmatpush1.msra.mxu0 0.0
  %1081 = vmatprep.subr.mxu0 0.0
  %1082 = vmatpush1.msra.mxu0 0.0
  %1083 = vmatprep.subr.mxu0 0.0
  %1084 = vmatpush1.msra.mxu0 0.0
  %1085 = vmatprep.subr.mxu0 0.0
  %1086 = vmatpush1.msra.mxu0 0.0
  %1087 = vmatprep.subr.mxu0 0.0
  %1088 = vmatpush1.msra.mxu0 0.0
  %1089 = vmatprep.subr.mxu0 0.0
  %1090 = vmatpush1.msra.mxu0 0.0
  %1091 = vmatprep.subr.mxu0 0.0
  %1092 = vmatpush1.msra.mxu0 0.0
  %1093 = vmatprep.subr.mxu0 0.0
  %1094 = vmatpush1.msra.mxu0 0.0
  %1095 = vmatprep.subr.mxu0 0.0
  %1096 = vmatpush1.msra.mxu0 0.0
  %1097 = vmatprep.subr.mxu0 0.0
  %1098 = vmatpush1.msra.mxu0 0.0
  %1099 = vmatprep.subr.mxu0 0.0
  %1100 = vmatpush1.msra.mxu0 0.0
  %1101 = vmatprep.subr.mxu0 0.0
  %1102 = vmatpush1.msra.mxu0 0.0
  %1103 = vmatprep.subr.mxu0 0.0
  %1104 = vmatpush1.msra.mxu0 0.0
  %1105 = vmatprep.subr.mxu0 0.0
  %1106 = vmatpush1.msra.mxu0 0.0
  %1107 = vmatprep.subr.mxu0 0.0
  %1108 = vmatpush1.msra.mxu0 0.0
  %1109 = vmatprep.subr.mxu0 0.0
  %1110 = vmatpush1.msra.mxu0 0.0
  %1111 = vmatprep.subr.mxu0 0.0
  %1112 = vmatpush1.msra.mxu0 0.0
  %1113 = vmatprep.subr.mxu0 0.0
  %1114 = vmatpush1.msra.mxu0 0.0
  %1115 = vmatprep.subr.mxu0 0.0
  %1116 = vmatpush1.msra.mxu0 0.0
  %1117 = vmatprep.subr.mxu0 0.0
  %1118 = vmatpush1.msra.mxu0 0.0
  %1119 = vmatprep.subr.mxu0 0.0
  %1120 = vmatpush1.msra.mxu0 0.0
  %1121 = vmatprep.subr.mxu0 0.0
  %1122 = vmatpush1.msra.mxu0 0.0
  %1123 = vmatprep.subr.mxu0 0.0
  %1124 = vmatpush1.msra.mxu0 0.0
  %1125 = vmatprep.subr.mxu0 0.0
  %1126 = vmatpush1.msra.mxu0 0.0
  %1127 = vmatprep.subr.mxu0 0.0
  %1128 = vmatpush1.msra.mxu0 0.0
  %1129 = vmatprep.subr.mxu0 0.0
  %1130 = vmatpush1.msra.mxu0 0.0
  %1131 = vmatprep.subr.mxu0 0.0
  %1132 = vmatpush1.msra.mxu0 0.0
  %1133 = vmatprep.mubr.f32.mxu0 0.0
  %1134 = vmatmul.mubr.f32.gmra.mrb[0].mxu0 %v183
  %v1135 = vpop.f32.mrb[0].mxu0
  %v1136 = vadd.f32 %v1050, %v1135
  %v1137 = vpop.f32.mrb[0].mxu0
  %v1138 = vadd.f32 %v1052, %v1137
  %1139 = vdwg.mxu0
  %v1140 = vld [vmem:[%s963] sm:$0xff]
  %v1141 = vld [vmem:[%s963 + $0x8] sm:$0xf]
  %v1142 = vmul.f32 %v1140, %v269
  %v1143 = vmul.f32 %v1141, %v267
  %v1146 = vcombine.high %v1142, %v1142
  %1147 = vrot.lane.b32.xlu0 %v1142, 15
  %v1148 = vpop.permute.xlu0 %1147
  %1149 = vrot.lane.b32.xlu0 %v1146, 15
  %v1150 = vpop.permute.xlu0 %1149
  %1151 = vrot.lane.b32.xlu0 %v1143, 15
  %v1152 = vpop.permute.xlu0 %1151
  %v1153 = vsel %vm285, %v1148, %v1150
  %v1154 = vsel %vm285, %v1150, %v1152
  %v1155 = vsel %vm94, %v1153, 0
  %v1157 = vsel %vm94, %v1154, 0
  %1159 = vmatprep.subr.mxu0 %v1157
  %1160 = vmatpush1.msra.mxu0 %v1155
  %1161 = vmatprep.subr.mxu0 0.0
  %1162 = vmatpush1.msra.mxu0 0.0
  %1163 = vmatprep.subr.mxu0 0.0
  %1164 = vmatpush1.msra.mxu0 0.0
  %1165 = vmatprep.subr.mxu0 0.0
  %1166 = vmatpush1.msra.mxu0 0.0
  %1167 = vmatprep.subr.mxu0 0.0
  %1168 = vmatpush1.msra.mxu0 0.0
  %1169 = vmatprep.subr.mxu0 0.0
  %1170 = vmatpush1.msra.mxu0 0.0
  %1171 = vmatprep.subr.mxu0 0.0
  %1172 = vmatpush1.msra.mxu0 0.0
  %1173 = vmatprep.subr.mxu0 0.0
  %1174 = vmatpush1.msra.mxu0 0.0
  %1175 = vmatprep.subr.mxu0 0.0
  %1176 = vmatpush1.msra.mxu0 0.0
  %1177 = vmatprep.subr.mxu0 0.0
  %1178 = vmatpush1.msra.mxu0 0.0
  %1179 = vmatprep.subr.mxu0 0.0
  %1180 = vmatpush1.msra.mxu0 0.0
  %1181 = vmatprep.subr.mxu0 0.0
  %1182 = vmatpush1.msra.mxu0 0.0
  %1183 = vmatprep.subr.mxu0 0.0
  %1184 = vmatpush1.msra.mxu0 0.0
  %1185 = vmatprep.subr.mxu0 0.0
  %1186 = vmatpush1.msra.mxu0 0.0
  %1187 = vmatprep.subr.mxu0 0.0
  %1188 = vmatpush1.msra.mxu0 0.0
  %1189 = vmatprep.subr.mxu0 0.0
  %1190 = vmatpush1.msra.mxu0 0.0
  %1191 = vmatprep.subr.mxu0 0.0
  %1192 = vmatpush1.msra.mxu0 0.0
  %1193 = vmatprep.subr.mxu0 0.0
  %1194 = vmatpush1.msra.mxu0 0.0
  %1195 = vmatprep.subr.mxu0 0.0
  %1196 = vmatpush1.msra.mxu0 0.0
  %1197 = vmatprep.subr.mxu0 0.0
  %1198 = vmatpush1.msra.mxu0 0.0
  %1199 = vmatprep.subr.mxu0 0.0
  %1200 = vmatpush1.msra.mxu0 0.0
  %1201 = vmatprep.subr.mxu0 0.0
  %1202 = vmatpush1.msra.mxu0 0.0
  %1203 = vmatprep.subr.mxu0 0.0
  %1204 = vmatpush1.msra.mxu0 0.0
  %1205 = vmatprep.subr.mxu0 0.0
  %1206 = vmatpush1.msra.mxu0 0.0
  %1207 = vmatprep.subr.mxu0 0.0
  %1208 = vmatpush1.msra.mxu0 0.0
  %1209 = vmatprep.subr.mxu0 0.0
  %1210 = vmatpush1.msra.mxu0 0.0
  %1211 = vmatprep.subr.mxu0 0.0
  %1212 = vmatpush1.msra.mxu0 0.0
  %1213 = vmatprep.subr.mxu0 0.0
  %1214 = vmatpush1.msra.mxu0 0.0
  %1215 = vmatprep.subr.mxu0 0.0
  %1216 = vmatpush1.msra.mxu0 0.0
  %1217 = vmatprep.subr.mxu0 0.0
  %1218 = vmatpush1.msra.mxu0 0.0
  %1219 = vmatprep.subr.mxu0 0.0
  %1220 = vmatpush1.msra.mxu0 0.0
  %1221 = vmatprep.subr.mxu0 0.0
  %1222 = vmatpush1.msra.mxu0 0.0
  %1223 = vmatprep.mubr.f32.mxu0 0.0
  %1224 = vmatmul.mubr.f32.gmra.mrb[0].mxu0 %v289
  %v1225 = vpop.f32.mrb[0].mxu0
  %v1226 = vadd.f32 0.0, %v1225
  %v1227 = vpop.f32.mrb[0].mxu0
  %v1228 = vadd.f32 0.0, %v1227
  %1229 = vdwg.mxu0
  %v1230 = vadd.f32 %v1136, %v1226
  %v1231 = vadd.f32 %v1138, %v1228
  %v1232 = vld [vmem:[%s963] sm:$0xff]
  %v1233 = vld [vmem:[%s963 + $0x8] sm:$0xf]
  %v1234 = vmul.f32 %v1232, %v374
  %v1235 = vmul.f32 %v1233, %v372
  %v1238 = vcombine.high %v1234, %v1234
  %1239 = vrot.lane.b32.xlu0 %v1234, 1
  %v1240 = vpop.permute.xlu0 %1239
  %1241 = vrot.lane.b32.xlu0 %v1238, 1
  %v1242 = vpop.permute.xlu0 %1241
  %1243 = vrot.lane.b32.xlu0 %v1235, 1
  %v1244 = vpop.permute.xlu0 %1243
  %v1245 = vsel %vm390, %v1240, %v1242
  %v1246 = vsel %vm390, %v1242, %v1244
  %v1247 = vsel %vm94, %v1245, 0
  %v1249 = vsel %vm94, %v1246, 0
  %1251 = vmatprep.subr.mxu0 %v1249
  %1252 = vmatpush1.msra.mxu0 %v1247
  %1253 = vmatprep.subr.mxu0 0.0
  %1254 = vmatpush1.msra.mxu0 0.0
  %1255 = vmatprep.subr.mxu0 0.0
  %1256 = vmatpush1.msra.mxu0 0.0
  %1257 = vmatprep.subr.mxu0 0.0
  %1258 = vmatpush1.msra.mxu0 0.0
  %1259 = vmatprep.subr.mxu0 0.0
  %1260 = vmatpush1.msra.mxu0 0.0
  %1261 = vmatprep.subr.mxu0 0.0
  %1262 = vmatpush1.msra.mxu0 0.0
  %1263 = vmatprep.subr.mxu0 0.0
  %1264 = vmatpush1.msra.mxu0 0.0
  %1265 = vmatprep.subr.mxu0 0.0
  %1266 = vmatpush1.msra.mxu0 0.0
  %1267 = vmatprep.subr.mxu0 0.0
  %1268 = vmatpush1.msra.mxu0 0.0
  %1269 = vmatprep.subr.mxu0 0.0
  %1270 = vmatpush1.msra.mxu0 0.0
  %1271 = vmatprep.subr.mxu0 0.0
  %1272 = vmatpush1.msra.mxu0 0.0
  %1273 = vmatprep.subr.mxu0 0.0
  %1274 = vmatpush1.msra.mxu0 0.0
  %1275 = vmatprep.subr.mxu0 0.0
  %1276 = vmatpush1.msra.mxu0 0.0
  %1277 = vmatprep.subr.mxu0 0.0
  %1278 = vmatpush1.msra.mxu0 0.0
  %1279 = vmatprep.subr.mxu0 0.0
  %1280 = vmatpush1.msra.mxu0 0.0
  %1281 = vmatprep.subr.mxu0 0.0
  %1282 = vmatpush1.msra.mxu0 0.0
  %1283 = vmatprep.subr.mxu0 0.0
  %1284 = vmatpush1.msra.mxu0 0.0
  %1285 = vmatprep.subr.mxu0 0.0
  %1286 = vmatpush1.msra.mxu0 0.0
  %1287 = vmatprep.subr.mxu0 0.0
  %1288 = vmatpush1.msra.mxu0 0.0
  %1289 = vmatprep.subr.mxu0 0.0
  %1290 = vmatpush1.msra.mxu0 0.0
  %1291 = vmatprep.subr.mxu0 0.0
  %1292 = vmatpush1.msra.mxu0 0.0
  %1293 = vmatprep.subr.mxu0 0.0
  %1294 = vmatpush1.msra.mxu0 0.0
  %1295 = vmatprep.subr.mxu0 0.0
  %1296 = vmatpush1.msra.mxu0 0.0
  %1297 = vmatprep.subr.mxu0 0.0
  %1298 = vmatpush1.msra.mxu0 0.0
  %1299 = vmatprep.subr.mxu0 0.0
  %1300 = vmatpush1.msra.mxu0 0.0
  %1301 = vmatprep.subr.mxu0 0.0
  %1302 = vmatpush1.msra.mxu0 0.0
  %1303 = vmatprep.subr.mxu0 0.0
  %1304 = vmatpush1.msra.mxu0 0.0
  %1305 = vmatprep.subr.mxu0 0.0
  %1306 = vmatpush1.msra.mxu0 0.0
  %1307 = vmatprep.subr.mxu0 0.0
  %1308 = vmatpush1.msra.mxu0 0.0
  %1309 = vmatprep.subr.mxu0 0.0
  %1310 = vmatpush1.msra.mxu0 0.0
  %1311 = vmatprep.subr.mxu0 0.0
  %1312 = vmatpush1.msra.mxu0 0.0
  %1313 = vmatprep.subr.mxu0 0.0
  %1314 = vmatpush1.msra.mxu0 0.0
  %1315 = vmatprep.mubr.f32.mxu0 0.0
  %1316 = vmatmul.mubr.f32.gmra.mrb[0].mxu0 %v394
  %v1317 = vpop.f32.mrb[0].mxu0
  %v1318 = vadd.f32 0.0, %v1317
  %v1319 = vpop.f32.mrb[0].mxu0
  %v1320 = vadd.f32 0.0, %v1319
  %1321 = vdwg.mxu0
  %v1322 = vadd.f32 %v1230, %v1318
  %v1323 = vadd.f32 %v1231, %v1320
  %v1324 = vld [vmem:[%s963 + $0x4] sm:$0xff]
  %v1326 = vcombine.high %v1324, %v1324
  %v1327 = vsel %vm94, %v1324, 0
  %v1329 = vsel %vm94, %v1326, 0
  %1331 = vmatprep.subr.mxu0 %v1329
  %1332 = vmatpush1.msra.mxu0 %v1327
  %1333 = vmatprep.subr.mxu0 0.0
  %1334 = vmatpush1.msra.mxu0 0.0
  %1335 = vmatprep.subr.mxu0 0.0
  %1336 = vmatpush1.msra.mxu0 0.0
  %1337 = vmatprep.subr.mxu0 0.0
  %1338 = vmatpush1.msra.mxu0 0.0
  %1339 = vmatprep.subr.mxu0 0.0
  %1340 = vmatpush1.msra.mxu0 0.0
  %1341 = vmatprep.subr.mxu0 0.0
  %1342 = vmatpush1.msra.mxu0 0.0
  %1343 = vmatprep.subr.mxu0 0.0
  %1344 = vmatpush1.msra.mxu0 0.0
  %1345 = vmatprep.subr.mxu0 0.0
  %1346 = vmatpush1.msra.mxu0 0.0
  %1347 = vmatprep.subr.mxu0 0.0
  %1348 = vmatpush1.msra.mxu0 0.0
  %1349 = vmatprep.subr.mxu0 0.0
  %1350 = vmatpush1.msra.mxu0 0.0
  %1351 = vmatprep.subr.mxu0 0.0
  %1352 = vmatpush1.msra.mxu0 0.0
  %1353 = vmatprep.subr.mxu0 0.0
  %1354 = vmatpush1.msra.mxu0 0.0
  %1355 = vmatprep.subr.mxu0 0.0
  %1356 = vmatpush1.msra.mxu0 0.0
  %1357 = vmatprep.subr.mxu0 0.0
  %1358 = vmatpush1.msra.mxu0 0.0
  %1359 = vmatprep.subr.mxu0 0.0
  %1360 = vmatpush1.msra.mxu0 0.0
  %1361 = vmatprep.subr.mxu0 0.0
  %1362 = vmatpush1.msra.mxu0 0.0
  %1363 = vmatprep.subr.mxu0 0.0
  %1364 = vmatpush1.msra.mxu0 0.0
  %1365 = vmatprep.subr.mxu0 0.0
  %1366 = vmatpush1.msra.mxu0 0.0
  %1367 = vmatprep.subr.mxu0 0.0
  %1368 = vmatpush1.msra.mxu0 0.0
  %1369 = vmatprep.subr.mxu0 0.0
  %1370 = vmatpush1.msra.mxu0 0.0
  %1371 = vmatprep.subr.mxu0 0.0
  %1372 = vmatpush1.msra.mxu0 0.0
  %1373 = vmatprep.subr.mxu0 0.0
  %1374 = vmatpush1.msra.mxu0 0.0
  %1375 = vmatprep.subr.mxu0 0.0
  %1376 = vmatpush1.msra.mxu0 0.0
  %1377 = vmatprep.subr.mxu0 0.0
  %1378 = vmatpush1.msra.mxu0 0.0
  %1379 = vmatprep.subr.mxu0 0.0
  %1380 = vmatpush1.msra.mxu0 0.0
  %1381 = vmatprep.subr.mxu0 0.0
  %1382 = vmatpush1.msra.mxu0 0.0
  %1383 = vmatprep.subr.mxu0 0.0
  %1384 = vmatpush1.msra.mxu0 0.0
  %1385 = vmatprep.subr.mxu0 0.0
  %1386 = vmatpush1.msra.mxu0 0.0
  %1387 = vmatprep.subr.mxu0 0.0
  %1388 = vmatpush1.msra.mxu0 0.0
  %1389 = vmatprep.subr.mxu0 0.0
  %1390 = vmatpush1.msra.mxu0 0.0
  %1391 = vmatprep.subr.mxu0 0.0
  %1392 = vmatpush1.msra.mxu0 0.0
  %1393 = vmatprep.subr.mxu0 0.0
  %1394 = vmatpush1.msra.mxu0 0.0
  %1395 = vmatprep.mubr.f32.mxu0 0.0
  %1396 = vmatmul.mubr.f32.gmra.mrb[0].mxu0 %v479
  %v1397 = vpop.f32.mrb[0].mxu0
  %v1398 = vadd.f32 0.0, %v1397
  %v1399 = vpop.f32.mrb[0].mxu0
  %v1400 = vadd.f32 0.0, %v1399
  %1401 = vdwg.mxu0
  %v1402 = vadd.f32 %v1322, %v1398
  %v1403 = vadd.f32 %v1323, %v1400
  %v1404 = vld [vmem:[%s963 + $0x4] sm:$0xff]
  %v1405 = vld [vmem:[%s963 + $0xc] sm:$0xf]
  %v1406 = vmul.f32 %v1404, %v563
  %v1407 = vmul.f32 %v1405, %v562
  %v1410 = vcombine.high %v1406, %v1406
  %1411 = vrot.lane.b32.xlu0 %v1406, 127
  %v1412 = vpop.permute.xlu0 %1411
  %1413 = vrot.lane.b32.xlu0 %v1410, 127
  %v1414 = vpop.permute.xlu0 %1413
  %1415 = vrot.lane.b32.xlu0 %v1407, 127
  %v1416 = vpop.permute.xlu0 %1415
  %v1417 = vsel %vm373, %v1412, %v1414
  %v1418 = vsel %vm373, %v1414, %v1416
  %v1419 = vsel %vm94, %v1417, 0
  %v1421 = vsel %vm94, %v1418, 0
  %1423 = vmatprep.subr.mxu0 %v1421
  %1424 = vmatpush1.msra.mxu0 %v1419
  %1425 = vmatprep.subr.mxu0 0.0
  %1426 = vmatpush1.msra.mxu0 0.0
  %1427 = vmatprep.subr.mxu0 0.0
  %1428 = vmatpush1.msra.mxu0 0.0
  %1429 = vmatprep.subr.mxu0 0.0
  %1430 = vmatpush1.msra.mxu0 0.0
  %1431 = vmatprep.subr.mxu0 0.0
  %1432 = vmatpush1.msra.mxu0 0.0
  %1433 = vmatprep.subr.mxu0 0.0
  %1434 = vmatpush1.msra.mxu0 0.0
  %1435 = vmatprep.subr.mxu0 0.0
  %1436 = vmatpush1.msra.mxu0 0.0
  %1437 = vmatprep.subr.mxu0 0.0
  %1438 = vmatpush1.msra.mxu0 0.0
  %1439 = vmatprep.subr.mxu0 0.0
  %1440 = vmatpush1.msra.mxu0 0.0
  %1441 = vmatprep.subr.mxu0 0.0
  %1442 = vmatpush1.msra.mxu0 0.0
  %1443 = vmatprep.subr.mxu0 0.0
  %1444 = vmatpush1.msra.mxu0 0.0
  %1445 = vmatprep.subr.mxu0 0.0
  %1446 = vmatpush1.msra.mxu0 0.0
  %1447 = vmatprep.subr.mxu0 0.0
  %1448 = vmatpush1.msra.mxu0 0.0
  %1449 = vmatprep.subr.mxu0 0.0
  %1450 = vmatpush1.msra.mxu0 0.0
  %1451 = vmatprep.subr.mxu0 0.0
  %1452 = vmatpush1.msra.mxu0 0.0
  %1453 = vmatprep.subr.mxu0 0.0
  %1454 = vmatpush1.msra.mxu0 0.0
  %1455 = vmatprep.subr.mxu0 0.0
  %1456 = vmatpush1.msra.mxu0 0.0
  %1457 = vmatprep.subr.mxu0 0.0
  %1458 = vmatpush1.msra.mxu0 0.0
  %1459 = vmatprep.subr.mxu0 0.0
  %1460 = vmatpush1.msra.mxu0 0.0
  %1461 = vmatprep.subr.mxu0 0.0
  %1462 = vmatpush1.msra.mxu0 0.0
  %1463 = vmatprep.subr.mxu0 0.0
  %1464 = vmatpush1.msra.mxu0 0.0
  %1465 = vmatprep.subr.mxu0 0.0
  %1466 = vmatpush1.msra.mxu0 0.0
  %1467 = vmatprep.subr.mxu0 0.0
  %1468 = vmatpush1.msra.mxu0 0.0
  %1469 = vmatprep.subr.mxu0 0.0
  %1470 = vmatpush1.msra.mxu0 0.0
  %1471 = vmatprep.subr.mxu0 0.0
  %1472 = vmatpush1.msra.mxu0 0.0
  %1473 = vmatprep.subr.mxu0 0.0
  %1474 = vmatpush1.msra.mxu0 0.0
  %1475 = vmatprep.subr.mxu0 0.0
  %1476 = vmatpush1.msra.mxu0 0.0
  %1477 = vmatprep.subr.mxu0 0.0
  %1478 = vmatpush1.msra.mxu0 0.0
  %1479 = vmatprep.subr.mxu0 0.0
  %1480 = vmatpush1.msra.mxu0 0.0
  %1481 = vmatprep.subr.mxu0 0.0
  %1482 = vmatpush1.msra.mxu0 0.0
  %1483 = vmatprep.subr.mxu0 0.0
  %1484 = vmatpush1.msra.mxu0 0.0
  %1485 = vmatprep.subr.mxu0 0.0
  %1486 = vmatpush1.msra.mxu0 0.0
  %1487 = vmatprep.mubr.f32.mxu0 0.0
  %1488 = vmatmul.mubr.f32.gmra.mrb[0].mxu0 %v582
  %v1489 = vpop.f32.mrb[0].mxu0
  %v1490 = vadd.f32 0.0, %v1489
  %v1491 = vpop.f32.mrb[0].mxu0
  %v1492 = vadd.f32 0.0, %v1491
  %1493 = vdwg.mxu0
  %v1494 = vadd.f32 %v1402, %v1490
  %v1495 = vadd.f32 %v1403, %v1492
  %v1496 = vld [vmem:[%s963 + $0x4] sm:$0xff]
  %v1497 = vld [vmem:[%s963 + $0xc] sm:$0xf]
  %v1498 = vmul.f32 %v1496, %v666
  %v1499 = vmul.f32 %v1497, %v665
  %v1502 = vcombine.high %v1498, %v1498
  %1503 = vrot.lane.b32.xlu0 %v1498, 113
  %v1504 = vpop.permute.xlu0 %1503
  %1505 = vrot.lane.b32.xlu0 %v1502, 113
  %v1506 = vpop.permute.xlu0 %1505
  %1507 = vrot.lane.b32.xlu0 %v1499, 113
  %v1508 = vpop.permute.xlu0 %1507
  %v1509 = vsel %vm268, %v1504, %v1506
  %v1510 = vsel %vm268, %v1506, %v1508
  %v1511 = vsel %vm94, %v1509, 0
  %v1513 = vsel %vm94, %v1510, 0
  %1515 = vmatprep.subr.mxu0 %v1513
  %1516 = vmatpush1.msra.mxu0 %v1511
  %1517 = vmatprep.subr.mxu0 0.0
  %1518 = vmatpush1.msra.mxu0 0.0
  %1519 = vmatprep.subr.mxu0 0.0
  %1520 = vmatpush1.msra.mxu0 0.0
  %1521 = vmatprep.subr.mxu0 0.0
  %1522 = vmatpush1.msra.mxu0 0.0
  %1523 = vmatprep.subr.mxu0 0.0
  %1524 = vmatpush1.msra.mxu0 0.0
  %1525 = vmatprep.subr.mxu0 0.0
  %1526 = vmatpush1.msra.mxu0 0.0
  %1527 = vmatprep.subr.mxu0 0.0
  %1528 = vmatpush1.msra.mxu0 0.0
  %1529 = vmatprep.subr.mxu0 0.0
  %1530 = vmatpush1.msra.mxu0 0.0
  %1531 = vmatprep.subr.mxu0 0.0
  %1532 = vmatpush1.msra.mxu0 0.0
  %1533 = vmatprep.subr.mxu0 0.0
  %1534 = vmatpush1.msra.mxu0 0.0
  %1535 = vmatprep.subr.mxu0 0.0
  %1536 = vmatpush1.msra.mxu0 0.0
  %1537 = vmatprep.subr.mxu0 0.0
  %1538 = vmatpush1.msra.mxu0 0.0
  %1539 = vmatprep.subr.mxu0 0.0
  %1540 = vmatpush1.msra.mxu0 0.0
  %1541 = vmatprep.subr.mxu0 0.0
  %1542 = vmatpush1.msra.mxu0 0.0
  %1543 = vmatprep.subr.mxu0 0.0
  %1544 = vmatpush1.msra.mxu0 0.0
  %1545 = vmatprep.subr.mxu0 0.0
  %1546 = vmatpush1.msra.mxu0 0.0
  %1547 = vmatprep.subr.mxu0 0.0
  %1548 = vmatpush1.msra.mxu0 0.0
  %1549 = vmatprep.subr.mxu0 0.0
  %1550 = vmatpush1.msra.mxu0 0.0
  %1551 = vmatprep.subr.mxu0 0.0
  %1552 = vmatpush1.msra.mxu0 0.0
  %1553 = vmatprep.subr.mxu0 0.0
  %1554 = vmatpush1.msra.mxu0 0.0
  %1555 = vmatprep.subr.mxu0 0.0
  %1556 = vmatpush1.msra.mxu0 0.0
  %1557 = vmatprep.subr.mxu0 0.0
  %1558 = vmatpush1.msra.mxu0 0.0
  %1559 = vmatprep.subr.mxu0 0.0
  %1560 = vmatpush1.msra.mxu0 0.0
  %1561 = vmatprep.subr.mxu0 0.0
  %1562 = vmatpush1.msra.mxu0 0.0
  %1563 = vmatprep.subr.mxu0 0.0
  %1564 = vmatpush1.msra.mxu0 0.0
  %1565 = vmatprep.subr.mxu0 0.0
  %1566 = vmatpush1.msra.mxu0 0.0
  %1567 = vmatprep.subr.mxu0 0.0
  %1568 = vmatpush1.msra.mxu0 0.0
  %1569 = vmatprep.subr.mxu0 0.0
  %1570 = vmatpush1.msra.mxu0 0.0
  %1571 = vmatprep.subr.mxu0 0.0
  %1572 = vmatpush1.msra.mxu0 0.0
  %1573 = vmatprep.subr.mxu0 0.0
  %1574 = vmatpush1.msra.mxu0 0.0
  %1575 = vmatprep.subr.mxu0 0.0
  %1576 = vmatpush1.msra.mxu0 0.0
  %1577 = vmatprep.subr.mxu0 0.0
  %1578 = vmatpush1.msra.mxu0 0.0
  %1579 = vmatprep.mubr.f32.mxu0 0.0
  %1580 = vmatmul.mubr.f32.gmra.mrb[0].mxu0 %v685
  %v1581 = vpop.f32.mrb[0].mxu0
  %v1582 = vadd.f32 0.0, %v1581
  %v1583 = vpop.f32.mrb[0].mxu0
  %v1584 = vadd.f32 0.0, %v1583
  %1585 = vdwg.mxu0
  %v1586 = vadd.f32 %v1494, %v1582
  %v1587 = vadd.f32 %v1495, %v1584
  %v1588 = vld [vmem:[%s963 + $0x4] sm:$0xff]
  %v1589 = vld [vmem:[%s963 + $0xc] sm:$0xf]
  %v1592 = vcombine.high %v1588, %v1588
  %1593 = vrot.lane.b32.xlu0 %v1588, 112
  %v1594 = vpop.permute.xlu0 %1593
  %1595 = vrot.lane.b32.xlu0 %v1592, 112
  %v1596 = vpop.permute.xlu0 %1595
  %1597 = vrot.lane.b32.xlu0 %v1589, 112
  %v1598 = vpop.permute.xlu0 %1597
  %v1599 = vsel %vm777, %v1594, %v1596
  %v1600 = vsel %vm777, %v1596, %v1598
  %v1601 = vsel %vm94, %v1599, 0
  %v1603 = vsel %vm94, %v1600, 0
  %1605 = vmatprep.subr.mxu0 %v1603
  %1606 = vmatpush1.msra.mxu0 %v1601
  %1607 = vmatprep.subr.mxu0 0.0
  %1608 = vmatpush1.msra.mxu0 0.0
  %1609 = vmatprep.subr.mxu0 0.0
  %1610 = vmatpush1.msra.mxu0 0.0
  %1611 = vmatprep.subr.mxu0 0.0
  %1612 = vmatpush1.msra.mxu0 0.0
  %1613 = vmatprep.subr.mxu0 0.0
  %1614 = vmatpush1.msra.mxu0 0.0
  %1615 = vmatprep.subr.mxu0 0.0
  %1616 = vmatpush1.msra.mxu0 0.0
  %1617 = vmatprep.subr.mxu0 0.0
  %1618 = vmatpush1.msra.mxu0 0.0
  %1619 = vmatprep.subr.mxu0 0.0
  %1620 = vmatpush1.msra.mxu0 0.0
  %1621 = vmatprep.subr.mxu0 0.0
  %1622 = vmatpush1.msra.mxu0 0.0
  %1623 = vmatprep.subr.mxu0 0.0
  %1624 = vmatpush1.msra.mxu0 0.0
  %1625 = vmatprep.subr.mxu0 0.0
  %1626 = vmatpush1.msra.mxu0 0.0
  %1627 = vmatprep.subr.mxu0 0.0
  %1628 = vmatpush1.msra.mxu0 0.0
  %1629 = vmatprep.subr.mxu0 0.0
  %1630 = vmatpush1.msra.mxu0 0.0
  %1631 = vmatprep.subr.mxu0 0.0
  %1632 = vmatpush1.msra.mxu0 0.0
  %1633 = vmatprep.subr.mxu0 0.0
  %1634 = vmatpush1.msra.mxu0 0.0
  %1635 = vmatprep.subr.mxu0 0.0
  %1636 = vmatpush1.msra.mxu0 0.0
  %1637 = vmatprep.subr.mxu0 0.0
  %1638 = vmatpush1.msra.mxu0 0.0
  %1639 = vmatprep.subr.mxu0 0.0
  %1640 = vmatpush1.msra.mxu0 0.0
  %1641 = vmatprep.subr.mxu0 0.0
  %1642 = vmatpush1.msra.mxu0 0.0
  %1643 = vmatprep.subr.mxu0 0.0
  %1644 = vmatpush1.msra.mxu0 0.0
  %1645 = vmatprep.subr.mxu0 0.0
  %1646 = vmatpush1.msra.mxu0 0.0
  %1647 = vmatprep.subr.mxu0 0.0
  %1648 = vmatpush1.msra.mxu0 0.0
  %1649 = vmatprep.subr.mxu0 0.0
  %1650 = vmatpush1.msra.mxu0 0.0
  %1651 = vmatprep.subr.mxu0 0.0
  %1652 = vmatpush1.msra.mxu0 0.0
  %1653 = vmatprep.subr.mxu0 0.0
  %1654 = vmatpush1.msra.mxu0 0.0
  %1655 = vmatprep.subr.mxu0 0.0
  %1656 = vmatpush1.msra.mxu0 0.0
  %1657 = vmatprep.subr.mxu0 0.0
  %1658 = vmatpush1.msra.mxu0 0.0
  %1659 = vmatprep.subr.mxu0 0.0
  %1660 = vmatpush1.msra.mxu0 0.0
  %1661 = vmatprep.subr.mxu0 0.0
  %1662 = vmatpush1.msra.mxu0 0.0
  %1663 = vmatprep.subr.mxu0 0.0
  %1664 = vmatpush1.msra.mxu0 0.0
  %1665 = vmatprep.subr.mxu0 0.0
  %1666 = vmatpush1.msra.mxu0 0.0
  %1667 = vmatprep.subr.mxu0 0.0
  %1668 = vmatpush1.msra.mxu0 0.0
  %1669 = vmatprep.mubr.f32.mxu0 0.0
  %1670 = vmatmul.mubr.f32.gmra.mrb[0].mxu0 %v781
  %v1671 = vpop.f32.mrb[0].mxu0
  %v1672 = vadd.f32 0.0, %v1671
  %v1673 = vpop.f32.mrb[0].mxu0
  %v1674 = vadd.f32 0.0, %v1673
  %1675 = vdwg.mxu0
  %v1676 = vadd.f32 %v1586, %v1672
  %v1677 = vadd.f32 %v1587, %v1674
  %v1678 = vld [vmem:[%s963 + $0x4] sm:$0xff]
  %v1679 = vld [vmem:[%s963 + $0xc] sm:$0xf]
  %v1680 = vmul.f32 %v1678, %v865
  %v1681 = vmul.f32 %v1679, %v864
  %v1684 = vcombine.high %v1680, %v1680
  %1685 = vrot.lane.b32.xlu0 %v1680, 111
  %v1686 = vpop.permute.xlu0 %1685
  %1687 = vrot.lane.b32.xlu0 %v1684, 111
  %v1688 = vpop.permute.xlu0 %1687
  %1689 = vrot.lane.b32.xlu0 %v1681, 111
  %v1690 = vpop.permute.xlu0 %1689
  %v1691 = vsel %vm69, %v1686, %v1688
  %v1692 = vsel %vm69, %v1688, %v1690
  %v1693 = vsel %vm94, %v1691, 0
  %v1695 = vsel %vm94, %v1692, 0
  %1697 = vmatprep.subr.mxu0 %v1695
  %1698 = vmatpush1.msra.mxu0 %v1693
  %1699 = vmatprep.subr.mxu0 0.0
  %1700 = vmatpush1.msra.mxu0 0.0
  %1701 = vmatprep.subr.mxu0 0.0
  %1702 = vmatpush1.msra.mxu0 0.0
  %1703 = vmatprep.subr.mxu0 0.0
  %1704 = vmatpush1.msra.mxu0 0.0
  %1705 = vmatprep.subr.mxu0 0.0
  %1706 = vmatpush1.msra.mxu0 0.0
  %1707 = vmatprep.subr.mxu0 0.0
  %1708 = vmatpush1.msra.mxu0 0.0
  %1709 = vmatprep.subr.mxu0 0.0
  %1710 = vmatpush1.msra.mxu0 0.0
  %1711 = vmatprep.subr.mxu0 0.0
  %1712 = vmatpush1.msra.mxu0 0.0
  %1713 = vmatprep.subr.mxu0 0.0
  %1714 = vmatpush1.msra.mxu0 0.0
  %1715 = vmatprep.subr.mxu0 0.0
  %1716 = vmatpush1.msra.mxu0 0.0
  %1717 = vmatprep.subr.mxu0 0.0
  %1718 = vmatpush1.msra.mxu0 0.0
  %1719 = vmatprep.subr.mxu0 0.0
  %1720 = vmatpush1.msra.mxu0 0.0
  %1721 = vmatprep.subr.mxu0 0.0
  %1722 = vmatpush1.msra.mxu0 0.0
  %1723 = vmatprep.subr.mxu0 0.0
  %1724 = vmatpush1.msra.mxu0 0.0
  %1725 = vmatprep.subr.mxu0 0.0
  %1726 = vmatpush1.msra.mxu0 0.0
  %1727 = vmatprep.subr.mxu0 0.0
  %1728 = vmatpush1.msra.mxu0 0.0
  %1729 = vmatprep.subr.mxu0 0.0
  %1730 = vmatpush1.msra.mxu0 0.0
  %1731 = vmatprep.subr.mxu0 0.0
  %1732 = vmatpush1.msra.mxu0 0.0
  %1733 = vmatprep.subr.mxu0 0.0
  %1734 = vmatpush1.msra.mxu0 0.0
  %1735 = vmatprep.subr.mxu0 0.0
  %1736 = vmatpush1.msra.mxu0 0.0
  %1737 = vmatprep.subr.mxu0 0.0
  %1738 = vmatpush1.msra.mxu0 0.0
  %1739 = vmatprep.subr.mxu0 0.0
  %1740 = vmatpush1.msra.mxu0 0.0
  %1741 = vmatprep.subr.mxu0 0.0
  %1742 = vmatpush1.msra.mxu0 0.0
  %1743 = vmatprep.subr.mxu0 0.0
  %1744 = vmatpush1.msra.mxu0 0.0
  %1745 = vmatprep.subr.mxu0 0.0
  %1746 = vmatpush1.msra.mxu0 0.0
  %1747 = vmatprep.subr.mxu0 0.0
  %1748 = vmatpush1.msra.mxu0 0.0
  %1749 = vmatprep.subr.mxu0 0.0
  %1750 = vmatpush1.msra.mxu0 0.0
  %1751 = vmatprep.subr.mxu0 0.0
  %1752 = vmatpush1.msra.mxu0 0.0
  %1753 = vmatprep.subr.mxu0 0.0
  %1754 = vmatpush1.msra.mxu0 0.0
  %1755 = vmatprep.subr.mxu0 0.0
  %1756 = vmatpush1.msra.mxu0 0.0
  %1757 = vmatprep.subr.mxu0 0.0
  %1758 = vmatpush1.msra.mxu0 0.0
  %1759 = vmatprep.subr.mxu0 0.0
  %1760 = vmatpush1.msra.mxu0 0.0
  %1761 = vmatprep.mubr.f32.mxu0 0.0
  %1762 = vmatmul.mubr.f32.gmra.mrb[0].mxu0 %v884
  %v1763 = vpop.f32.mrb[0].mxu0
  %v1764 = vadd.f32 0.0, %v1763
  %v1765 = vpop.f32.mrb[0].mxu0
  %v1766 = vadd.f32 0.0, %v1765
  %1767 = vdwg.mxu0
  %v1768 = vadd.f32 %v1676, %v1764
  %v1769 = vadd.f32 %v1677, %v1766
  %v1770 = vadd.f32 %v961, %v962
  %1771 = vadd.xlane.f32.xlu0 %v1770
  %v1772 = vpop.xlane.xlu0 %1771
  %v1773 = vadd.f32 %v1772, 0.0
  %v1774 = vmul.f32 %v961, %v961
  %v1775 = vmul.f32 %v962, %v962
  %v1776 = vadd.f32 %v1774, %v1775
  %1777 = vadd.xlane.f32.xlu0 %v1776
  %v1778 = vpop.xlane.xlu0 %1777
  %v1779 = vadd.f32 %v1778, 0.0
  %v1780 = vadd.f32 %v1768, %v1769
  %1781 = vadd.xlane.f32.xlu0 %v1780
  %v1782 = vpop.xlane.xlu0 %1781
  %v1783 = vadd.f32 %v1773, %v1782
  %v1784 = vmul.f32 %v1768, %v1768
  %v1785 = vmul.f32 %v1769, %v1769
  %v1786 = vadd.f32 %v1784, %v1785
  %1787 = vadd.xlane.f32.xlu0 %v1786
  %v1788 = vpop.xlane.xlu0 %1787
  %v1789 = vadd.f32 %v1779, %v1788
  %v1790 = vmul.f32 %v1783, 0.001953125
  %v1791 = vmul.f32 %v1789, 0.001953125
  %v1792 = vmul.f32 %v1790, %v1790
  %v1793 = vsub.f32 %v1791, %v1792
  %v1794 = vld [vmem:[%s2] sm:$0xff]
  %v1795 = vadd.f32 %v1793, 1e-05
  %v1796 = vrsqrt.pop %v1795
  %v1797 = vmul.f32 %v1794, %v1796
  %v1798 = vmul.f32 %v1790, %v1797
  %1800 = vrot.lane.b32.xlu0 %v1798, 1
  %v1801 = vpop.permute.xlu0 %1800
  %v1803 = vsub.f32 %v1794, %v1801
  %1805 = vset.pattern.permute.xlu0 0
  %1806 = vperm.xlu0 %1805, %v1797
  %v1807 = vpop.permute.xlu0 %1806
  %v1809 = vmul.f32 %v961, %v1807
  %v1810 = vmul.f32 %v962, %v1807
  %1812 = vset.pattern.permute.xlu0 1
  %1813 = vperm.xlu0 %1812, %v1803
  %v1814 = vpop.permute.xlu0 %1813
  %v1816 = vadd.f32 %v1809, %v1814
  %v1817 = vadd.f32 %v1810, %v1814
  %v1818 = vmax.f32 %v1816, 0.0
  %v1819 = vmax.f32 %v1817, 0.0
  %1820 = vst [vmem:[%s3] sm:$0xff] %v1818
  %1821 = vst [vmem:[%s3 + $0x8] sm:$0xff] %v1819
  %v1822 = vmul.f32 %v1768, %v1807
  %v1823 = vmul.f32 %v1769, %v1807
  %v1824 = vadd.f32 %v1822, %v1814
  %v1825 = vadd.f32 %v1823, %v1814
  %v1826 = vmax.f32 %v1824, 0.0
  %v1827 = vmax.f32 %v1825, 0.0
  %s1828 = scalar_lea.vmem %s3, 16
  %1829 = vst [vmem:[%s1828] sm:$0xff] %v1826
  %1830 = vst [vmem:[%s1828 + $0x8] sm:$0xff] %v1827
  // Predicated region
  $region14: #{conv_block_forward.1} parent=0 // pred_check
    _
  $region15: #{conv_block_forward.1} parent=0 // pred_check_branch
    %1832 = sbr.rel (0) target = $region17
  $region16: #{conv_block_forward.1} parent=0 // pred_region
    _
  $region17: #{conv_block_forward.1} parent=0 // pred_fallthru
    _
  // Predicated region
  $region18: #{conv_block_forward.1} parent=0 // pred_check
    _
  $region19: #{conv_block_forward.1} parent=0 // pred_check_branch
    %1834 = sbr.rel (0) target = $region21
  $region20: #{conv_block_forward.1} parent=0 // pred_region
    _
  $region21: #{conv_block_forward.1} parent=0 // pred_fallthru
    _

</llo_original>
